<compile_context>
chip_gen: v7x
topology: tpu7x:2x2x1
jax: 0.10.0
libtpu: 0.0.40
codegen_flags: <defaults>
</compile_context>

<pallas_src>
import functools

import jax
import jax.numpy as jnp
from jax.experimental import pallas as pl
from jax.experimental.pallas import tpu as pltpu


def _compute_hidden_dim(hidden_dim, multiple_of, ffn_dim_multiplier=None):
    hidden_dim = int(2 * hidden_dim / 3)
    if ffn_dim_multiplier is not None:
        hidden_dim = int(ffn_dim_multiplier * hidden_dim)
    hidden_dim = multiple_of * ((hidden_dim + multiple_of - 1) // multiple_of)
    return hidden_dim


def _vmem_capacity_bytes():
    """Physical VMEM of the current chip; conservative 64 MiB fallback."""
    try:
        info = pltpu.get_tpu_info()
        for name in ("vmem_capacity_bytes", "vmem_bytes"):
            cap = getattr(info, name, None)
            if cap:
                return int(cap)
    except Exception:
        pass
    return 64 << 20


def _round_up(v, m):
    return ((v + m - 1) // m) * m


def plan_tiles(n_rows, dim, hidden, compute_dtype, out_dtype):
    """Chip-aware (tm, th, vmem_limit_bytes) derived from actual VMEM capacity."""
    cap = _vmem_capacity_bytes()
    budget = int(cap * 0.85)            # headroom for compiler-internal scratch
    cb = jnp.dtype(compute_dtype).itemsize
    ob = jnp.dtype(out_dtype).itemsize

    def footprint(tm, th):
        per_block = (tm * dim * cb          # x tile
                     + dim * 2 * th * cb    # fused [w1|w3] tile
                     + th * dim * cb        # w2 tile
                     + dim * 4              # RMSNorm weight (f32)
                     + tm * 4               # owner ids
                     + tm * dim * ob)       # resident output tile
        return 2 * per_block + tm * dim * 4  # 2x double-buffer + f32 accumulator

    # Row-tile cap: never exceed the row count, and keep >= 2 row tiles so the
    # second TensorCore (v7x megacore) has work even for small batches.
    tm_cap = max(8, _round_up(n_rows, 8))
    if n_rows >= 16:
        tm_cap = min(tm_cap, max(8, _round_up((n_rows + 1) // 2, 8)))

    # Hidden-tile candidates: whole hidden (nh == 1) first, then 128-multiples.
    th_cands = [hidden] + [t for t in (2048, 1024, 512, 256, 128)
                           if t < hidden and hidden % t == 0]

    # Prefer shrinking th before tm (th does not change arithmetic intensity).
    for tm in (512, 384, 256, 192, 128, 64, 32, 16, 8):
        tm = min(tm, tm_cap)
        for th in th_cands:
            if footprint(tm, th) <= budget:
                limit = int(min(cap, max(footprint(tm, th) * 5 // 4, 32 << 20)))
                return tm, th, limit
    # Fall through: smallest plan; let the compiler complain if it cannot fit.
    return min(8, tm_cap), th_cands[-1], int(cap)


def prepare_ffn_weights(w1, w3, w2, norm_w, *, th, compute_dtype=jnp.bfloat16):
    """One-time weight packing/cast (do NOT call per forward pass).

    Returns (w13, w2c, gnorm):
      w13   (n_mod, dim, 2*hidden) compute_dtype, hidden-tile interleaved so
            columns [h*2*th : h*2*th + th] are w1's tile h and the next th
            columns are w3's tile h.
      w2c   (n_mod, hidden, dim)   compute_dtype
      gnorm (n_mod, 1, dim)        float32 RMSNorm weights
    """
    n_mod, dim, hidden = w1.shape
    assert w3.shape == (n_mod, dim, hidden) and w2.shape == (n_mod, hidden, dim)
    assert hidden % th == 0
    nh = hidden // th
    w1t = w1.reshape(n_mod, dim, nh, th)
    w3t = w3.reshape(n_mod, dim, nh, th)
    w13 = jnp.concatenate([w1t, w3t], axis=-1).reshape(n_mod, dim, 2 * hidden)
    return (w13.astype(compute_dtype), w2.astype(compute_dtype),
            norm_w.astype(jnp.float32)[:, None, :])


def _ffn_kernel(active_ref, eff_ref, owner_ref, x_ref, w13_ref, w2_ref, g_ref,
                o_ref, acc_ref, *, eps, th, nh, n_mod):
    """Grid step (row-tile r, modality m, hidden-tile h)."""
    r = pl.program_id(0)
    m = pl.program_id(1)
    h = pl.program_id(2)
    flag = active_ref[r * n_mod + m]          # tile owns >=1 token of modality m

    # Zero the resident output tile once per row tile.
    # TODO(synk): rows covered by no modality mask are undefined (torch.empty)
    # in the PyTorch module; here they are defined as zeros.
    @pl.when((m == 0) & (h == 0))
    def _():
        o_ref[...] = jnp.zeros_like(o_ref)

    # Skip the whole FFN when this row tile owns no token of this modality
    # (the matching index_maps also elide the weight DMA for this case).
    @pl.when(flag != 0)
    def _():
        x = x_ref[...]                                            # (tm, dim)
        h13 = jnp.dot(x, w13_ref[...],
                      preferred_element_type=jnp.float32)         # (tm, 2*th)
        h1 = h13[:, :th]
        h3 = h13[:, th:]
        hh = (h1 * jax.nn.sigmoid(h1)) * h3                       # f32, (tm, th)
        part = jnp.dot(hh.astype(w2_ref.dtype), w2_ref[...],
                       preferred_element_type=jnp.float32)        # (tm, dim)

        if nh > 1:
            @pl.when(h == 0)
            def _():
                acc_ref[...] = part

            @pl.when(h > 0)
            def _():
                acc_ref[...] = acc_ref[...] + part

        # Last hidden tile: RMSNorm + owner-based merge into the resident output.
        @pl.when(h == nh - 1)
        def _():
            y = part if nh == 1 else acc_ref[...]
            ms = jnp.mean(y * y, axis=-1, keepdims=True)
            y = y * jax.lax.rsqrt(ms + eps) * g_ref[...].astype(jnp.float32)
            sel = owner_ref[...] == m                             # (tm, 1) bool
            o_ref[...] = jnp.where(sel, y.astype(o_ref.dtype), o_ref[...])


def modality_untied_feedforward(x, modality_masks, w13, w2, gnorm, *,
                                th, tm=None, eps=1e-5, vmem_limit_bytes=None):
    """x: (N, dim); modality_masks: (n_mod, N) bool; weights from
    prepare_ffn_weights (already packed and in compute dtype)."""
    N, dim = x.shape
    n_mod, hidden, dim_w = w2.shape
    assert dim_w == dim and w13.shape == (n_mod, dim, 2 * hidden)
    assert gnorm.shape == (n_mod, 1, dim)
    assert modality_masks.shape == (n_mod, N)
    assert hidden % th == 0
    nh = hidden // th
    compute_dtype = w13.dtype

    if tm is None or vmem_limit_bytes is None:
        ptm, _, plim = plan_tiles(N, dim, hidden, compute_dtype, x.dtype)
        tm = ptm if tm is None else tm
        vmem_limit_bytes = plim if vmem_limit_bytes is None else vmem_limit_bytes
    assert tm % 8 == 0

    # Per-row winning modality.  The PyTorch module merges in reverse order so
    # the lowest modality index wins on overlaps; -1 = no modality covers row.
    mod_ids = jnp.arange(n_mod, dtype=jnp.int32)
    owner = jnp.min(jnp.where(modality_masks, mod_ids[:, None], n_mod), axis=0)
    owner = jnp.where(owner == n_mod, -1, owner).astype(jnp.int32)

    # Pad rows to a multiple of the row tile (padded rows are owned by nobody).
    n_row_tiles = -(-N // tm)
    Np = n_row_tiles * tm
    if Np != N:
        x_p = jnp.pad(x, ((0, Np - N), (0, 0)))
        owner_p = jnp.concatenate([owner, jnp.full((Np - N,), -1, jnp.int32)])
    else:
        x_p, owner_p = x, owner

    # Flat 1D scalar-prefetch tables (natural (row_tile, modality) order):
    #   active[k]: row tile r owns >=1 token of modality m   (k = r*n_mod + m)
    #   eff[k]:    modality whose weights should be resident at step k -- the
    #              slot's own modality when active, else a carried copy of the
    #              last active one, so the weight block index repeats and the
    #              pipeline elides the DMA for inactive (row-tile, modality)
    #              pairs entirely.
    owner_tiles = owner_p.reshape(n_row_tiles, tm)
    active = (owner_tiles[:, None, :] == mod_ids[None, :, None]).any(-1)
    flat_act = active.reshape(-1)                                  # (R*n_mod,)
    k_idx = jnp.arange(n_row_tiles * n_mod, dtype=jnp.int32)
    mods_flat = jnp.tile(mod_ids, n_row_tiles)
    last_act = jax.lax.cummax(jnp.where(flat_act, k_idx, -1), axis=0)
    eff = jnp.where(last_act >= 0, mods_flat[jnp.maximum(last_act, 0)], 0)
    active_i = flat_act.astype(jnp.int32)
    eff_i = eff.astype(jnp.int32)

    xc = x_p.astype(compute_dtype)                 # activation cast only (cheap)
    owner_col = owner_p.reshape(Np, 1)

    def _w13_idx(r, m, h, act, eff_t):
        k = r * n_mod + m
        a = act[k]
        # Inactive: repeat the previously resident (eff, nh-1) block -> no DMA.
        return eff_t[k], 0, h * a + (nh - 1) * (1 - a)

    def _w2_idx(r, m, h, act, eff_t):
        k = r * n_mod + m
        a = act[k]
        return eff_t[k], h * a + (nh - 1) * (1 - a), 0

    def _g_idx(r, m, h, act, eff_t):
        return eff_t[r * n_mod + m], 0, 0

    kernel = functools.partial(_ffn_kernel, eps=eps, th=th, nh=nh, n_mod=n_mod)
    out = pl.pallas_call(
        kernel,
        out_shape=jax.ShapeDtypeStruct((Np, dim), x.dtype),
        grid_spec=pltpu.PrefetchScalarGridSpec(
            num_scalar_prefetch=2,
            grid=(n_row_tiles, n_mod, nh),
            in_specs=[
                pl.BlockSpec((tm, 1), lambda r, m, h, act, eff_t: (r, 0)),    # owner
                pl.BlockSpec((tm, dim), lambda r, m, h, act, eff_t: (r, 0)),  # x
                pl.BlockSpec((None, dim, 2 * th), _w13_idx),                  # [w1|w3]
                pl.BlockSpec((None, th, dim), _w2_idx),                       # w2
                pl.BlockSpec((None, 1, dim), _g_idx),                         # norm w
            ],
            out_specs=pl.BlockSpec((tm, dim), lambda r, m, h, act, eff_t: (r, 0)),
            scratch_shapes=[pltpu.VMEM((tm, dim), jnp.float32)],
        ),
        compiler_params=pltpu.CompilerParams(
            dimension_semantics=("parallel", "arbitrary", "arbitrary"),
            vmem_limit_bytes=int(vmem_limit_bytes)),
    )(active_i, eff_i, owner_col, xc, w13, w2, gnorm)

    return out[:N] if Np != N else out


def _reference(x, masks, w1, w3, w2, norm_w, *, eps=1e-5,
               compute_dtype=jnp.float32):
    """Pure-JAX reference mirroring the PyTorch forward (same compute dtype)."""
    n_mod = w1.shape[0]
    out = jnp.zeros((x.shape[0], w2.shape[-1]), x.dtype)
    xc = x.astype(compute_dtype)
    for i in range(n_mod - 1, -1, -1):
        h1 = jnp.dot(xc, w1[i].astype(compute_dtype),
                     preferred_element_type=jnp.float32)
        h3 = jnp.dot(xc, w3[i].astype(compute_dtype),
                     preferred_element_type=jnp.float32)
        hh = (h1 * jax.nn.sigmoid(h1)) * h3
        y = jnp.dot(hh.astype(compute_dtype), w2[i].astype(compute_dtype),
                    preferred_element_type=jnp.float32)
        y = y * jax.lax.rsqrt(jnp.mean(y * y, axis=-1, keepdims=True) + eps)
        y = y * norm_w[i]
        out = jnp.where(masks[i][:, None], y.astype(out.dtype), out)
    return out


if __name__ == "__main__":
    # Small shapes consistent with the module's constructor math.
    dim = 256
    hidden_dim_param = 512
    multiple_of = 128
    n_modalities = 2
    N = 256
    hidden = _compute_hidden_dim(hidden_dim_param, multiple_of)   # -> 384

    key = jax.random.PRNGKey(0)
    kx, k1, k3, k2 = jax.random.split(key, 4)

    x = jax.random.normal(kx, (N, dim), dtype=jnp.float32)
    w1 = jax.random.normal(k1, (n_modalities, dim, hidden), jnp.float32) * dim ** -0.5
    w3 = jax.random.normal(k3, (n_modalities, dim, hidden), jnp.float32) * dim ** -0.5
    w2 = jax.random.normal(k2, (n_modalities, hidden, dim), jnp.float32) * hidden ** -0.5
    norm_w = jnp.ones((n_modalities, dim), jnp.float32)   # RMSNorm weight default

    # Masks: mixed modalities, an overlap region (modality 0 has priority) and a
    # few rows covered by nothing (defined as zeros here).
    row = jnp.arange(N)
    mask0 = (row < 128) | ((row >= 192) & (row < 252))
    mask1 = (row >= 128) & (row < 201)
    modality_masks = jnp.stack([mask0, mask1], axis=0)

    # --- f32 compute path (tight check; chip-planned tiles) ------------------
    tm_f32, th_f32, lim_f32 = plan_tiles(N, dim, hidden, jnp.float32, x.dtype)
    w13_f, w2_f, gn_f = prepare_ffn_weights(w1, w3, w2, norm_w, th=th_f32,
                                            compute_dtype=jnp.float32)
    out_f32 = modality_untied_feedforward(
        x, modality_masks, w13_f, w2_f, gn_f,
        th=th_f32, tm=tm_f32, vmem_limit_bytes=lim_f32)
    out_f32 = jax.block_until_ready(out_f32)
    ref_f32 = _reference(x, modality_masks, w1, w3, w2, norm_w,
                         compute_dtype=jnp.float32)
    assert jnp.allclose(out_f32, ref_f32, rtol=1e-4, atol=1e-4), "f32 mismatch"

    # --- f32, forced multi-hidden-tile plan (exercises accumulator + elision) -
    w13_s, w2_s, gn_s = prepare_ffn_weights(w1, w3, w2, norm_w, th=128,
                                            compute_dtype=jnp.float32)
    out_split = modality_untied_feedforward(
        x, modality_masks, w13_s, w2_s, gn_s, th=128, tm=64)
    out_split = jax.block_until_ready(out_split)
    assert jnp.allclose(out_split, ref_f32, rtol=1e-4, atol=1e-4), "split mismatch"

    # --- bf16 MXU path (default deployment dtype; weights pre-cast once) -----
    tm_bf, th_bf, lim_bf = plan_tiles(N, dim, hidden, jnp.bfloat16, x.dtype)
    w13_b, w2_b, gn_b = prepare_ffn_weights(w1, w3, w2, norm_w, th=th_bf,
                                            compute_dtype=jnp.bfloat16)
    out_bf16 = modality_untied_feedforward(
        x, modality_masks, w13_b, w2_b, gn_b,
        th=th_bf, tm=tm_bf, vmem_limit_bytes=lim_bf)
    out_bf16 = jax.block_until_ready(out_bf16)
    ref_bf16 = _reference(x, modality_masks, w1, w3, w2, norm_w,
                          compute_dtype=jnp.bfloat16)
    assert jnp.allclose(out_bf16, ref_bf16, rtol=2e-2, atol=2e-2), "bf16 mismatch"

    print("KERNEL_OK")
</pallas_src>

<mosaic_0001>
module attributes {stable_mosaic.version = 11 : i64} {
  func.func @_ffn_kernel(%arg0: i32, %arg1: i32, %arg2: i32, %arg3: memref<4xi32, #tpu.memory_space<smem>>, %arg4: memref<4xi32, #tpu.memory_space<smem>>, %arg5: memref<128x1xi32, #tpu.memory_space<vmem>>, %arg6: memref<128x256xf32, #tpu.memory_space<vmem>>, %arg7: memref<1x256x768xf32, #tpu.memory_space<vmem>>, %arg8: memref<1x384x256xf32, #tpu.memory_space<vmem>>, %arg9: memref<1x1x256xf32, #tpu.memory_space<vmem>>, %arg10: memref<128x256xf32, #tpu.memory_space<vmem>>, %arg11: memref<128x256xf32, #tpu.memory_space<vmem>>) attributes {dimension_semantics = [#tpu.dimension_semantics<parallel>, #tpu.dimension_semantics<arbitrary>, #tpu.dimension_semantics<arbitrary>], iteration_bounds = array<i64: 2, 2, 1>, scalar_prefetch = 2 : i64, scratch_operands = 1 : i64, tpu.core_type = #tpu.core_type<tc>, window_params = [{transform_indices = @transform_0, window_bounds = array<i64: 128, 1>}, {transform_indices = @transform_1, window_bounds = array<i64: 128, 256>}, {transform_indices = @transform_2, window_bounds = array<i64: 1, 256, 768>}, {transform_indices = @transform_3, window_bounds = array<i64: 1, 384, 256>}, {transform_indices = @transform_4, window_bounds = array<i64: 1, 1, 256>}, {transform_indices = @transform_5, window_bounds = array<i64: 128, 256>}]} {
    %c2_i32 = arith.constant 2 : i32
    %0 = arith.muli %arg0, %c2_i32 : i32
    %1 = arith.addi %0, %arg1 : i32
    %2 = arith.index_cast %1 : i32 to index
    %3 = memref.load %arg3[%2] : memref<4xi32, #tpu.memory_space<smem>>
    %c0_i32 = arith.constant 0 : i32
    %4 = arith.cmpi eq, %arg1, %c0_i32 : i32
    %c0_i32_0 = arith.constant 0 : i32
    %5 = arith.cmpi eq, %arg2, %c0_i32_0 : i32
    %6 = arith.andi %4, %5 : i1
    %7 = arith.extui %6 : i1 to i32
    %c0_i32_1 = arith.constant 0 : i32
    %8 = arith.cmpi ne, %7, %c0_i32_1 : i32
    scf.if %8 {
      %cst = arith.constant 0.000000e+00 : f32
      %12 = vector.broadcast %cst : f32 to vector<128x256xf32>
      %c0 = arith.constant 0 : index
      %c0_4 = arith.constant 0 : index
      %13 = vector.load %arg10[%c0, %c0_4] : memref<128x256xf32, #tpu.memory_space<vmem>>, vector<128x256xf32>
      tpu.vector_store %arg10[%c0, %c0_4], %12 {strides = array<i32>} : memref<128x256xf32, #tpu.memory_space<vmem>>, vector<128x256xf32>,
    } else {
    }
    %c0_i32_2 = arith.constant 0 : i32
    %9 = arith.cmpi ne, %3, %c0_i32_2 : i32
    %10 = arith.extui %9 : i1 to i32
    %c0_i32_3 = arith.constant 0 : i32
    %11 = arith.cmpi ne, %10, %c0_i32_3 : i32
    scf.if %11 {
      %c0 = arith.constant 0 : index
      %c0_4 = arith.constant 0 : index
      %12 = vector.load %arg6[%c0, %c0_4] : memref<128x256xf32, #tpu.memory_space<vmem>>, vector<128x256xf32>
      %c0_5 = arith.constant 0 : index
      %c0_6 = arith.constant 0 : index
      %c0_7 = arith.constant 0 : index
      %13 = vector.load %arg7[%c0_5, %c0_6, %c0_7] : memref<1x256x768xf32, #tpu.memory_space<vmem>>, vector<1x256x768xf32>
      %14 = vector.shape_cast %13 : vector<1x256x768xf32> to vector<256x768xf32>
      %cst = arith.constant dense<0.000000e+00> : vector<128x768xf32>
      %15 = tpu.matmul %12, %14, %cst {dimension_numbers = #tpu.dot_dimension_numbers<[1], [0], [0], [1], [0, 0, 1, 1], [], []>} : vector<128x256xf32>, vector<256x768xf32>, vector<128x768xf32> -> vector<128x768xf32>
      %16 = vector.extract_strided_slice %15 {offsets = [0, 0], sizes = [128, 384], strides = [1, 1]} : vector<128x768xf32> to vector<128x384xf32>
      %17 = vector.extract_strided_slice %15 {offsets = [0, 384], sizes = [128, 384], strides = [1, 1]} : vector<128x768xf32> to vector<128x384xf32>
      %18 = arith.negf %16 : vector<128x384xf32>
      %19 = math.exp %18 : vector<128x384xf32>
      %cst_8 = arith.constant 1.000000e+00 : f32
      %20 = vector.broadcast %cst_8 : f32 to vector<128x384xf32>
      %21 = arith.addf %20, %19 : vector<128x384xf32>
      %22 = arith.divf %20, %21 : vector<128x384xf32>
      %23 = arith.mulf %16, %22 : vector<128x384xf32>
      %24 = arith.mulf %23, %17 : vector<128x384xf32>
      %c0_9 = arith.constant 0 : index
      %c0_10 = arith.constant 0 : index
      %c0_11 = arith.constant 0 : index
      %25 = vector.load %arg8[%c0_9, %c0_10, %c0_11] : memref<1x384x256xf32, #tpu.memory_space<vmem>>, vector<1x384x256xf32>
      %26 = vector.shape_cast %25 : vector<1x384x256xf32> to vector<384x256xf32>
      %cst_12 = arith.constant dense<0.000000e+00> : vector<128x256xf32>
      %27 = tpu.matmul %24, %26, %cst_12 {dimension_numbers = #tpu.dot_dimension_numbers<[1], [0], [0], [1], [0, 0, 1, 1], [], []>} : vector<128x384xf32>, vector<384x256xf32>, vector<128x256xf32> -> vector<128x256xf32>
      %c0_i32_13 = arith.constant 0 : i32
      %28 = arith.cmpi eq, %arg2, %c0_i32_13 : i32
      %29 = arith.extui %28 : i1 to i32
      %c0_i32_14 = arith.constant 0 : i32
      %30 = arith.cmpi ne, %29, %c0_i32_14 : i32
      scf.if %30 {
        %31 = arith.mulf %27, %27 : vector<128x256xf32>
        %cst_15 = arith.constant dense<0.000000e+00> : vector<128xf32>
        %32 = vector.multi_reduction <add>, %31, %cst_15 [1] : vector<128x256xf32> to vector<128xf32>
        %33 = vector.shape_cast %32 : vector<128xf32> to vector<128x1xf32>
        %cst_16 = arith.constant 2.560000e+02 : f32
        %34 = vector.broadcast %cst_16 : f32 to vector<128x1xf32>
        %35 = arith.divf %33, %34 : vector<128x1xf32>
        %cst_17 = arith.constant 9.99999974E-6 : f32
        %36 = vector.broadcast %cst_17 : f32 to vector<128x1xf32>
        %37 = arith.addf %35, %36 : vector<128x1xf32>
        %38 = math.rsqrt %37 : vector<128x1xf32>
        %39 = vector.broadcast %38 : vector<128x1xf32> to vector<128x256xf32>
        %40 = arith.mulf %27, %39 : vector<128x256xf32>
        %c0_18 = arith.constant 0 : index
        %c0_19 = arith.constant 0 : index
        %c0_20 = arith.constant 0 : index
        %41 = vector.load %arg9[%c0_18, %c0_19, %c0_20] : memref<1x1x256xf32, #tpu.memory_space<vmem>>, vector<1x1x256xf32>
        %42 = vector.shape_cast %41 : vector<1x1x256xf32> to vector<1x256xf32>
        %43 = vector.broadcast %42 : vector<1x256xf32> to vector<128x256xf32>
        %44 = arith.mulf %40, %43 : vector<128x256xf32>
        %c0_21 = arith.constant 0 : index
        %c0_22 = arith.constant 0 : index
        %45 = vector.load %arg5[%c0_21, %c0_22] : memref<128x1xi32, #tpu.memory_space<vmem>>, vector<128x1xi32>
        %46 = vector.broadcast %arg1 : i32 to vector<128x1xi32>
        %47 = arith.cmpi eq, %45, %46 : vector<128x1xi32>
        %c0_23 = arith.constant 0 : index
        %c0_24 = arith.constant 0 : index
        %48 = vector.load %arg10[%c0_23, %c0_24] : memref<128x256xf32, #tpu.memory_space<vmem>>, vector<128x256xf32>
        %49 = vector.shape_cast %47 : vector<128x1xi1> to vector<128x1xi1>
        %50 = vector.broadcast %49 : vector<128x1xi1> to vector<128x256xi1>
        %51 = arith.select %50, %44, %48 : vector<128x256xi1>, vector<128x256xf32>
        %c0_25 = arith.constant 0 : index
        %c0_26 = arith.constant 0 : index
        %52 = vector.load %arg10[%c0_25, %c0_26] : memref<128x256xf32, #tpu.memory_space<vmem>>, vector<128x256xf32>
        tpu.vector_store %arg10[%c0_25, %c0_26], %51 {strides = array<i32>} : memref<128x256xf32, #tpu.memory_space<vmem>>, vector<128x256xf32>,
      } else {
      }
    } else {
    }
    return
  }
  func.func @transform_0(%arg0: i32, %arg1: i32, %arg2: i32, %arg3: memref<4xi32, #tpu.memory_space<smem>>, %arg4: memref<4xi32, #tpu.memory_space<smem>>) -> (i32, i32) {
    %c0_i32 = arith.constant 0 : i32
    %c0_i32_0 = arith.constant 0 : i32
    return %arg0, %c0_i32 : i32, i32
  }
  func.func @transform_1(%arg0: i32, %arg1: i32, %arg2: i32, %arg3: memref<4xi32, #tpu.memory_space<smem>>, %arg4: memref<4xi32, #tpu.memory_space<smem>>) -> (i32, i32) {
    %c0_i32 = arith.constant 0 : i32
    %c0_i32_0 = arith.constant 0 : i32
    return %arg0, %c0_i32 : i32, i32
  }
  func.func @transform_2(%arg0: i32, %arg1: i32, %arg2: i32, %arg3: memref<4xi32, #tpu.memory_space<smem>>, %arg4: memref<4xi32, #tpu.memory_space<smem>>) -> (i32, i32, i32) {
    %c2_i32 = arith.constant 2 : i32
    %0 = arith.muli %arg0, %c2_i32 : i32
    %1 = arith.addi %0, %arg1 : i32
    %2 = arith.index_cast %1 : i32 to index
    %3 = memref.load %arg3[%2] : memref<4xi32, #tpu.memory_space<smem>>
    %4 = arith.index_cast %1 : i32 to index
    %5 = memref.load %arg4[%4] : memref<4xi32, #tpu.memory_space<smem>>
    %6 = arith.muli %arg2, %3 : i32
    %c1_i32 = arith.constant 1 : i32
    %7 = arith.subi %c1_i32, %3 : i32
    %c0_i32 = arith.constant 0 : i32
    %8 = arith.muli %c0_i32, %7 : i32
    %9 = arith.addi %6, %8 : i32
    %c0_i32_0 = arith.constant 0 : i32
    %c0_i32_1 = arith.constant 0 : i32
    return %5, %c0_i32_0, %9 : i32, i32, i32
  }
  func.func @transform_3(%arg0: i32, %arg1: i32, %arg2: i32, %arg3: memref<4xi32, #tpu.memory_space<smem>>, %arg4: memref<4xi32, #tpu.memory_space<smem>>) -> (i32, i32, i32) {
    %c2_i32 = arith.constant 2 : i32
    %0 = arith.muli %arg0, %c2_i32 : i32
    %1 = arith.addi %0, %arg1 : i32
    %2 = arith.index_cast %1 : i32 to index
    %3 = memref.load %arg3[%2] : memref<4xi32, #tpu.memory_space<smem>>
    %4 = arith.index_cast %1 : i32 to index
    %5 = memref.load %arg4[%4] : memref<4xi32, #tpu.memory_space<smem>>
    %6 = arith.muli %arg2, %3 : i32
    %c1_i32 = arith.constant 1 : i32
    %7 = arith.subi %c1_i32, %3 : i32
    %c0_i32 = arith.constant 0 : i32
    %8 = arith.muli %c0_i32, %7 : i32
    %9 = arith.addi %6, %8 : i32
    %c0_i32_0 = arith.constant 0 : i32
    %c0_i32_1 = arith.constant 0 : i32
    return %5, %9, %c0_i32_0 : i32, i32, i32
  }
  func.func @transform_4(%arg0: i32, %arg1: i32, %arg2: i32, %arg3: memref<4xi32, #tpu.memory_space<smem>>, %arg4: memref<4xi32, #tpu.memory_space<smem>>) -> (i32, i32, i32) {
    %c2_i32 = arith.constant 2 : i32
    %0 = arith.muli %arg0, %c2_i32 : i32
    %1 = arith.addi %0, %arg1 : i32
    %2 = arith.index_cast %1 : i32 to index
    %3 = memref.load %arg4[%2] : memref<4xi32, #tpu.memory_space<smem>>
    %c0_i32 = arith.constant 0 : i32
    %c0_i32_0 = arith.constant 0 : i32
    %c0_i32_1 = arith.constant 0 : i32
    return %3, %c0_i32, %c0_i32_0 : i32, i32, i32
  }
  func.func @transform_5(%arg0: i32, %arg1: i32, %arg2: i32, %arg3: memref<4xi32, #tpu.memory_space<smem>>, %arg4: memref<4xi32, #tpu.memory_space<smem>>) -> (i32, i32) {
    %c0_i32 = arith.constant 0 : i32
    %c0_i32_0 = arith.constant 0 : i32
    return %arg0, %c0_i32 : i32, i32
  }
}

</mosaic_0001>

<llo_original>
// kernel: tpu_custom_call.1
$region0: #{tpu_custom_call.1}
  #allocation0 [shape = 'u32[]', space=smem, size = 0x4, offset = 0x4, fixed_abs, tag = 'smem constant byte address 0x4 - core index']
  #allocation1 [shape = 'u32[144,128]{1,0:T(1,128)}', space=vmem, size = 0x12000, scoped, tag = 'internal scratch']
  #allocation2 [shape = 'f32[128,256]{1,0:T(8,128)}', space=vmem, size = 0x20000, scoped, tag = 'scratch operand']
  #allocation3 [shape = 's32[1]{0}', space=sflag, size = 0x4, scoped, tag = 'scoped memory for tpu_custom_call.1']
  #allocation4 [shape = 'u8[512]{0}', space=smem, size = 0x200, scoped, tag = 'prefetched SMEM operand 0']
  #allocation5 [shape = 'u8[512]{0}', space=smem, size = 0x200, scoped, tag = 'prefetched SMEM operand 1']
  %s0 = inlined_call_operand.hbm [shape: s32[4], index: 0, kind: input, shape index: {}]
  %s1 = inlined_call_operand.hbm [shape: s32[4], index: 1, kind: input, shape index: {}]
  %s2 = inlined_call_operand.vmem [shape: s32[256,1], index: 2, kind: input, shape index: {}]
  %s3 = inlined_call_operand.hbm [shape: f32[256,256], index: 3, kind: input, shape index: {}]
  %s4 = inlined_call_operand.hbm [shape: f32[2,256,768], index: 4, kind: input, shape index: {}]
  %s5 = inlined_call_operand.hbm [shape: f32[2,384,256], index: 5, kind: input, shape index: {}]
  %s6 = inlined_call_operand.hbm [shape: f32[2,1,256], index: 6, kind: input, shape index: {}]
  %s7 = inlined_call_operand.hbm [shape: f32[256,256], index: 7, kind: output, shape index: {}]
  %s8 = sld [smem:[#allocation0]]
  $region81: #{tpu_custom_call.1} parent=0
    _
  %s10 = ssub.s32 1, %s8
  %s11 = scalar_select 0, %s10, %s8
  %13 = dma.hbm_to_smem %s0, 16, [#allocation4], [#allocation3]
  %15 = dma.hbm_to_smem %s1, 16, [#allocation5], [#allocation3]
  %16 = dma.done [#allocation3], 32
  %17 = sfence
  $region1: #{tpu_custom_call.1} parent=0
    #allocation6 [shape = 'u8[262144]{0}', space=vmem, size = 0x40000, scoped, tag = 'input window, operand 3']
    #allocation7 [shape = 's32[2]{0}', space=sflag, size = 0x8, scoped, tag = 'scoped memory for tpu_custom_call.1']
    #allocation8 [shape = 's32[2]{0}', space=sflag, size = 0x8, scoped, tag = 'scoped memory for tpu_custom_call.1']
    #allocation9 [shape = 'u8[1572864]{0}', space=vmem, size = 0x180000, scoped, tag = 'input window, operand 4']
    #allocation10 [shape = 's32[2]{0}', space=sflag, size = 0x8, scoped, tag = 'scoped memory for tpu_custom_call.1']
    #allocation11 [shape = 'u8[786432]{0}', space=vmem, size = 0xc0000, scoped, tag = 'input window, operand 5']
    #allocation12 [shape = 'u8[2048]{0}', space=vmem, size = 0x800, scoped, tag = 'input window, operand 6']
    #allocation13 [shape = 's32[2]{0}', space=sflag, size = 0x8, scoped, tag = 'scoped memory for tpu_custom_call.1']
    #allocation14 [shape = 'u8[262144]{0}', space=vmem, size = 0x40000, scoped, tag = 'output window, operand 0']
    %18 = vsyncpa [#allocation7], 0
    %s19 = scalar_lea.sflag [#allocation7], 1
    %20 = vsyncpa %s19, 0
    %21 = vsyncpa [#allocation10], 0
    %s22 = scalar_lea.sflag [#allocation10], 1
    %23 = vsyncpa %s22, 0
    %24 = vsyncpa [#allocation13], 0
    %s25 = scalar_lea.sflag [#allocation13], 1
    %26 = vsyncpa %s25, 0
    %27 = vsyncpa [#allocation8], 0
    %s28 = scalar_lea.sflag [#allocation8], 1
    %29 = vsyncpa %s28, 0
    loop: start=0, step=1, limit=6
    $region2: #{tpu_custom_call.1} parent=1 // loop_pre_header
      _
    $region3: #{tpu_custom_call.1} parent=1 // loop_header
      %s31 = sphi 0, %s35
      %p32 = scmp.ge.s32.totalorder %s31, 6
      %s38 = sphi 0, %s57
      %s39 = sphi 0, %s53
      %s40 = sphi 0, %s49
      %s41 = sphi 0, %s38
      %s42 = sphi 0, %s39
      %s43 = sphi 0, %s40
      %s44 = sphi 0, %s41
      %s45 = sphi 0, %s42
      %s46 = sphi 0, %s43
      %s60 = sphi 0, %s62
      %s63 = sphi 0, %s60
      %s64 = sphi 0, %s63
      %s80 = sphi 0, %s64
      %s86 = sphi 0, %s88
      %s89 = sphi 0, %s86
      %s90 = sphi 0, %s89
      %s106 = sphi 0, %s90
      %s124 = sphi 0, %s126
      %s127 = sphi 0, %s124
      %s128 = sphi 0, %s127
      %s144 = sphi 0, %s128
      %s162 = sphi 0, %s164
      %s165 = sphi 0, %s162
      %s166 = sphi 0, %s165
      %s182 = sphi 0, %s166
      %s194 = sphi 0, %s196
      %s197 = sphi 0, %s194
      %s198 = sphi 0, %s197
      %s214 = sphi 0, %s198
      %s220 = sphi 0, %s222
      %s223 = sphi 0, %s220
      %s224 = sphi 0, %s223
      %s240 = sphi 0, %s224
    $region4: #{tpu_custom_call.1} parent=1 // loop_header_branch
      %34 = sbr.rel (%p32) target = $region8
    $region5: #{tpu_custom_call.1} parent=1 // loop_body
      %s36 = ssub.s32 %s31, 1
      %s37 = ssub.s32 %s31, 2
      %s47 = sadd.s32 1, %s40
      %p48 = scmp.ge.s32.totalorder %s47, 1
      %s49 = scalar_select %p48, 0, %s47
      %s50 = sadd.s32 1, %s39
      %s51 = scalar_select %p48, %s50, %s39
      %p52 = scmp.ge.s32.totalorder %s51, 2
      %s53 = scalar_select %p52, 0, %s51
      %s54 = sadd.s32 1, %s38
      %s55 = scalar_select %p52, %s54, %s38
      %p56 = scmp.ge.s32.totalorder %s55, 2
      %s57 = scalar_select %p56, 0, %s55
      %s58 = ssub.s32 %s38, %s57
      %p59 = scmp.eq.s32.totalorder %s58, 0
      %s61 = sadd.s32 %s60, 1
      %s62 = scalar_select %p59, %s60, %s61
      %p65 = pneg %p59
      %p66 = scmp.eq.s32.totalorder %s31, 3
      %p67 = por %p65, %p66
      %p68 = scmp.ne.s32.totalorder %s60, %s63
      %p69 = scmp.eq.s32.totalorder %s31, 0
      %p70 = por %p68, %p69
      %p71 = scmp.ne.s32.totalorder %s60, %s63
      %p72 = scmp.eq.s32.totalorder %s36, 3
      %p73 = por %p71, %p72
      %p74 = scmp.ne.s32.totalorder %s63, %s64
      %p75 = scmp.eq.s32.totalorder %s36, 0
      %p76 = por %p74, %p75
      %p77 = scmp.ne.s32.totalorder %s63, %s64
      %p78 = scmp.eq.s32.totalorder %s37, 3
      %p79 = por %p77, %p78
      %p81 = scmp.ne.s32.totalorder %s64, %s80
      %p82 = scmp.eq.s32.totalorder %s37, 0
      %p83 = por %p81, %p82
      %s84 = ssub.s32 %s38, %s57
      %p85 = scmp.eq.s32.totalorder %s84, 0
      %s87 = sadd.s32 %s86, 1
      %s88 = scalar_select %p85, %s86, %s87
      %p91 = pneg %p85
      %p92 = scmp.eq.s32.totalorder %s31, 3
      %p93 = por %p91, %p92
      %p94 = scmp.ne.s32.totalorder %s86, %s89
      %p95 = scmp.eq.s32.totalorder %s31, 0
      %p96 = por %p94, %p95
      %p97 = scmp.ne.s32.totalorder %s86, %s89
      %p98 = scmp.eq.s32.totalorder %s36, 3
      %p99 = por %p97, %p98
      %p100 = scmp.ne.s32.totalorder %s89, %s90
      %p101 = scmp.eq.s32.totalorder %s36, 0
      %p102 = por %p100, %p101
      %p103 = scmp.ne.s32.totalorder %s89, %s90
      %p104 = scmp.eq.s32.totalorder %s37, 3
      %p105 = por %p103, %p104
      %p107 = scmp.ne.s32.totalorder %s90, %s106
      %p108 = scmp.eq.s32.totalorder %s37, 0
      %p109 = por %p107, %p108
      %s110 = smul.u32 %s38, 2
      %s111 = sadd.s32 %s110, %s39
      %s112 = sld [smem:[#allocation4 + %s111]]
      %s113 = sld [smem:[#allocation5 + %s111]]
      %s114 = smul.u32 %s40, %s112
      %s115 = smul.u32 %s57, 2
      %s116 = sadd.s32 %s115, %s53
      %s117 = sld [smem:[#allocation4 + %s116]]
      %s118 = sld [smem:[#allocation5 + %s116]]
      %s119 = smul.u32 %s49, %s117
      %s120 = ssub.s32 %s113, %s118
      %s121 = ssub.s32 %s114, %s119
      %s122 = sor.u32 %s120, %s121
      %p123 = scmp.eq.s32.totalorder %s122, 0
      %s125 = sadd.s32 %s124, 1
      %s126 = scalar_select %p123, %s124, %s125
      %p129 = pneg %p123
      %p130 = scmp.eq.s32.totalorder %s31, 3
      %p131 = por %p129, %p130
      %p132 = scmp.ne.s32.totalorder %s124, %s127
      %p133 = scmp.eq.s32.totalorder %s31, 0
      %p134 = por %p132, %p133
      %p135 = scmp.ne.s32.totalorder %s124, %s127
      %p136 = scmp.eq.s32.totalorder %s36, 3
      %p137 = por %p135, %p136
      %p138 = scmp.ne.s32.totalorder %s127, %s128
      %p139 = scmp.eq.s32.totalorder %s36, 0
      %p140 = por %p138, %p139
      %p141 = scmp.ne.s32.totalorder %s127, %s128
      %p142 = scmp.eq.s32.totalorder %s37, 3
      %p143 = por %p141, %p142
      %p145 = scmp.ne.s32.totalorder %s128, %s144
      %p146 = scmp.eq.s32.totalorder %s37, 0
      %p147 = por %p145, %p146
      %s148 = smul.u32 %s38, 2
      %s149 = sadd.s32 %s148, %s39
      %s150 = sld [smem:[#allocation4 + %s149]]
      %s151 = sld [smem:[#allocation5 + %s149]]
      %s152 = smul.u32 %s40, %s150
      %s153 = smul.u32 %s57, 2
      %s154 = sadd.s32 %s153, %s53
      %s155 = sld [smem:[#allocation4 + %s154]]
      %s156 = sld [smem:[#allocation5 + %s154]]
      %s157 = smul.u32 %s49, %s155
      %s158 = ssub.s32 %s151, %s156
      %s159 = ssub.s32 %s152, %s157
      %s160 = sor.u32 %s158, %s159
      %p161 = scmp.eq.s32.totalorder %s160, 0
      %s163 = sadd.s32 %s162, 1
      %s164 = scalar_select %p161, %s162, %s163
      %p167 = pneg %p161
      %p168 = scmp.eq.s32.totalorder %s31, 3
      %p169 = por %p167, %p168
      %p170 = scmp.ne.s32.totalorder %s162, %s165
      %p171 = scmp.eq.s32.totalorder %s31, 0
      %p172 = por %p170, %p171
      %p173 = scmp.ne.s32.totalorder %s162, %s165
      %p174 = scmp.eq.s32.totalorder %s36, 3
      %p175 = por %p173, %p174
      %p176 = scmp.ne.s32.totalorder %s165, %s166
      %p177 = scmp.eq.s32.totalorder %s36, 0
      %p178 = por %p176, %p177
      %p179 = scmp.ne.s32.totalorder %s165, %s166
      %p180 = scmp.eq.s32.totalorder %s37, 3
      %p181 = por %p179, %p180
      %p183 = scmp.ne.s32.totalorder %s166, %s182
      %p184 = scmp.eq.s32.totalorder %s37, 0
      %p185 = por %p183, %p184
      %s186 = smul.u32 %s38, 2
      %s187 = sadd.s32 %s186, %s39
      %s188 = sld [smem:[#allocation5 + %s187]]
      %s189 = smul.u32 %s57, 2
      %s190 = sadd.s32 %s189, %s53
      %s191 = sld [smem:[#allocation5 + %s190]]
      %s192 = ssub.s32 %s188, %s191
      %p193 = scmp.eq.s32.totalorder %s192, 0
      %s195 = sadd.s32 %s194, 1
      %s196 = scalar_select %p193, %s194, %s195
      %p199 = pneg %p193
      %p200 = scmp.eq.s32.totalorder %s31, 3
      %p201 = por %p199, %p200
      %p202 = scmp.ne.s32.totalorder %s194, %s197
      %p203 = scmp.eq.s32.totalorder %s31, 0
      %p204 = por %p202, %p203
      %p205 = scmp.ne.s32.totalorder %s194, %s197
      %p206 = scmp.eq.s32.totalorder %s36, 3
      %p207 = por %p205, %p206
      %p208 = scmp.ne.s32.totalorder %s197, %s198
      %p209 = scmp.eq.s32.totalorder %s36, 0
      %p210 = por %p208, %p209
      %p211 = scmp.ne.s32.totalorder %s197, %s198
      %p212 = scmp.eq.s32.totalorder %s37, 3
      %p213 = por %p211, %p212
      %p215 = scmp.ne.s32.totalorder %s198, %s214
      %p216 = scmp.eq.s32.totalorder %s37, 0
      %p217 = por %p215, %p216
      %s218 = ssub.s32 %s38, %s57
      %p219 = scmp.eq.s32.totalorder %s218, 0
      %s221 = sadd.s32 %s220, 1
      %s222 = scalar_select %p219, %s220, %s221
      %p225 = pneg %p219
      %p226 = scmp.eq.s32.totalorder %s31, 3
      %p227 = por %p225, %p226
      %p228 = scmp.ne.s32.totalorder %s220, %s223
      %p229 = scmp.eq.s32.totalorder %s31, 0
      %p230 = por %p228, %p229
      %p231 = scmp.ne.s32.totalorder %s220, %s223
      %p232 = scmp.eq.s32.totalorder %s36, 3
      %p233 = por %p231, %p232
      %p234 = scmp.ne.s32.totalorder %s223, %s224
      %p235 = scmp.eq.s32.totalorder %s36, 0
      %p236 = por %p234, %p235
      %p237 = scmp.ne.s32.totalorder %s223, %s224
      %p238 = scmp.eq.s32.totalorder %s37, 3
      %p239 = por %p237, %p238
      %p241 = scmp.ne.s32.totalorder %s224, %s240
      %p242 = scmp.eq.s32.totalorder %s37, 0
      %p243 = por %p241, %p242
      %p244 = scmp.le.s32.totalorder 1, %s31
      %p245 = scmp.lt.s32.totalorder %s31, 5
      %p246 = pnand %p244, %p245
      %p247 = pneg %p246
      // Predicated region
      $region9: #{tpu_custom_call.1} parent=5 // pred_check
        _
      $region10: #{tpu_custom_call.1} parent=5 // pred_check_branch
        %249 = sbr.rel (%p246) target = $region12
      $region11: #{tpu_custom_call.1} parent=5 // pred_region
        %s250 = ssub.s32 %s31, 1
      $region12: #{tpu_custom_call.1} parent=5 // pred_fallthru
        _
      %p251 = scmp.lt.s32.totalorder %s31, 4
      // Predicated region
      $region13: #{tpu_custom_call.1} parent=5 // pred_check
        %p252 = pneg %p251
      $region14: #{tpu_custom_call.1} parent=5 // pred_check_branch
        %254 = sbr.rel (%p252) target = $region16
      $region15: #{tpu_custom_call.1} parent=5 // pred_region
        // Predicated region
        $region17: #{tpu_custom_call.1} parent=15 // pred_check
          %p255 = pneg %p70
        $region18: #{tpu_custom_call.1} parent=15 // pred_check_branch
          %257 = sbr.rel (%p255) target = $region20
        $region19: #{tpu_custom_call.1} parent=15 // pred_region
          %s258 = smul.u32 16, %s38
          %p259 = scmp.lt.s32.totalorder %s258, 31
          %s260 = scalar_select %p259, %s258, 31
          %s261 = smul.addr %s260, 8
          %s262 = scalar_lea.vmem %s2, %s261
          %s263 = smul.u32 16, %s38
        $region20: #{tpu_custom_call.1} parent=15 // pred_fallthru
          _
        // Predicated region
        $region21: #{tpu_custom_call.1} parent=15 // pred_check
          %p264 = pneg %p96
        $region22: #{tpu_custom_call.1} parent=15 // pred_check_branch
          %266 = sbr.rel (%p264) target = $region24
        $region23: #{tpu_custom_call.1} parent=15 // pred_region
          %s267 = sand.u32 %s86, 1
          %s268 = scalar_lea.sflag [#allocation7], %s267
          %s269 = sand.u32 %s86, 1
          %s270 = smul.addr %s269, 256
          %s271 = scalar_lea.vmem [#allocation6], %s270
          %s272 = smul.u32 16, %s38
          %s274 = ssub.s32 4096, 4096
          %275 = vsyncadd %s268, %s274
          %s276 = smul.addr %s272, 2
          %s277 = smul.addr %s276, 128
          %s278 = scalar_lea.hbm %s3, %s277
          %s279 = sshll.u32 %s271, 4
          %s280 = int_to_ptr.vmem [resolvable:$true] %s279
          %285 = dma.hbm_to_vmem [thread:$0]  %s278, 4096, %s280, %s268, 256, 256, 16
        $region24: #{tpu_custom_call.1} parent=15 // pred_fallthru
          _
        // Predicated region
        $region25: #{tpu_custom_call.1} parent=15 // pred_check
          %p286 = pneg %p134
        $region26: #{tpu_custom_call.1} parent=15 // pred_check_branch
          %288 = sbr.rel (%p286) target = $region28
        $region27: #{tpu_custom_call.1} parent=15 // pred_region
          %s289 = sand.u32 %s31, 1
          %s290 = scalar_lea.sflag [#allocation10], %s289
          %s291 = sand.u32 %s124, 1
          %s292 = smul.addr %s291, 1536
          %s293 = scalar_lea.vmem [#allocation9], %s292
          %s294 = smul.u32 %s38, 2
          %s295 = sadd.s32 %s294, %s39
          %s296 = sld [smem:[#allocation4 + %s295]]
          %s297 = sld [smem:[#allocation5 + %s295]]
          %s298 = smul.u32 %s40, %s296
          %s299 = smul.u32 6, %s298
          %s301 = ssub.s32 24576, 24576
          %302 = vsyncadd %s290, %s301
          %s303 = smul.addr %s297, 192
          %s304 = sadd.s32 %s299, %s303
          %s305 = smul.addr %s304, 128
          %s306 = scalar_lea.hbm %s4, %s305
          %s307 = sshll.u32 %s293, 4
          %s308 = int_to_ptr.vmem [resolvable:$true] %s307
          %313 = dma.hbm_to_vmem [thread:$0]  %s306, 24576, %s308, %s290, 768, 768, 48
        $region28: #{tpu_custom_call.1} parent=15 // pred_fallthru
          _
        // Predicated region
        $region29: #{tpu_custom_call.1} parent=15 // pred_check
          %p314 = pneg %p172
        $region30: #{tpu_custom_call.1} parent=15 // pred_check_branch
          %316 = sbr.rel (%p314) target = $region32
        $region31: #{tpu_custom_call.1} parent=15 // pred_region
          %s317 = sand.u32 %s31, 1
          %s318 = scalar_lea.sflag [#allocation10], %s317
          %s319 = sand.u32 %s162, 1
          %s320 = smul.addr %s319, 768
          %s321 = scalar_lea.vmem [#allocation11], %s320
          %s322 = smul.u32 %s38, 2
          %s323 = sadd.s32 %s322, %s39
          %s324 = sld [smem:[#allocation4 + %s323]]
          %s325 = sld [smem:[#allocation5 + %s323]]
          %s326 = smul.u32 %s40, %s324
          %s327 = smul.u32 48, %s326
          %s329 = ssub.s32 12288, 12288
          %330 = vsyncadd %s318, %s329
          %s331 = smul.addr %s327, 2
          %s332 = smul.addr %s325, 96
          %s333 = sadd.s32 %s331, %s332
          %s334 = smul.addr %s333, 128
          %s335 = scalar_lea.hbm %s5, %s334
          %s336 = sshll.u32 %s321, 4
          %s337 = int_to_ptr.vmem [resolvable:$true] %s336
          %342 = dma.hbm_to_vmem [thread:$0]  %s335, 12288, %s337, %s318, 256, 256, 16
        $region32: #{tpu_custom_call.1} parent=15 // pred_fallthru
          _
        // Predicated region
        $region33: #{tpu_custom_call.1} parent=15 // pred_check
          %p343 = pneg %p204
        $region34: #{tpu_custom_call.1} parent=15 // pred_check_branch
          %345 = sbr.rel (%p343) target = $region36
        $region35: #{tpu_custom_call.1} parent=15 // pred_region
          %s346 = sand.u32 %s194, 1
          %s347 = scalar_lea.sflag [#allocation13], %s346
          %s348 = sand.u32 %s194, 1
          %s349 = smul.addr %s348, 2
          %s350 = scalar_lea.vmem [#allocation12], %s349
          %s351 = smul.u32 %s38, 2
          %s352 = sadd.s32 %s351, %s39
          %s353 = sld [smem:[#allocation5 + %s352]]
          %s355 = ssub.s32 32, 32
          %356 = vsyncadd %s347, %s355
          %s357 = smul.addr %s353, 2
          %s358 = smul.addr %s357, 16
          %s359 = scalar_lea.hbm %s6, %s358
          %s361 = sshll.u32 %s350, 4
          %s362 = int_to_ptr.vmem [resolvable:$true] %s361
          %364 = dma.hbm_to_vmem [thread:$0]  %s359, 32, %s362, %s347
        $region36: #{tpu_custom_call.1} parent=15 // pred_fallthru
          _
      $region16: #{tpu_custom_call.1} parent=5 // pred_fallthru
        _
      %p365 = scmp.le.s32.totalorder 1, %s31
      %p366 = scmp.lt.s32.totalorder %s31, 5
      %p367 = pnand %p365, %p366
      %p368 = pneg %p367
      // Predicated region
      $region37: #{tpu_custom_call.1} parent=5 // pred_check
        _
      $region38: #{tpu_custom_call.1} parent=5 // pred_check_branch
        %370 = sbr.rel (%p367) target = $region40
      $region39: #{tpu_custom_call.1} parent=5 // pred_region
        %s371 = ssub.s32 %s31, 1
        %s372 = sand.u32 %s89, 1
        %s373 = scalar_lea.sflag [#allocation7], %s372
        %s374 = sand.u32 %s89, 1
        %s375 = smul.addr %s374, 256
        %s376 = scalar_lea.vmem [#allocation6], %s375
        // Predicated region
        $region41: #{tpu_custom_call.1} parent=39 // pred_check
          %p377 = pneg %p102
        $region42: #{tpu_custom_call.1} parent=39 // pred_check_branch
          %379 = sbr.rel (%p377) target = $region44
        $region43: #{tpu_custom_call.1} parent=39 // pred_region
          %380 = dma.done %s373, 4096
        $region44: #{tpu_custom_call.1} parent=39 // pred_fallthru
          _
        %s381 = sand.u32 %s36, 1
        %s382 = scalar_lea.sflag [#allocation10], %s381
        %s383 = sand.u32 %s127, 1
        %s384 = smul.addr %s383, 1536
        %s385 = scalar_lea.vmem [#allocation9], %s384
        // Predicated region
        $region45: #{tpu_custom_call.1} parent=39 // pred_check
          %p386 = pneg %p140
        $region46: #{tpu_custom_call.1} parent=39 // pred_check_branch
          %388 = sbr.rel (%p386) target = $region48
        $region47: #{tpu_custom_call.1} parent=39 // pred_region
          %389 = dma.done %s382, 24576
        $region48: #{tpu_custom_call.1} parent=39 // pred_fallthru
          _
        %s390 = sand.u32 %s36, 1
        %s391 = scalar_lea.sflag [#allocation10], %s390
        %s392 = sand.u32 %s165, 1
        %s393 = smul.addr %s392, 768
        %s394 = scalar_lea.vmem [#allocation11], %s393
        // Predicated region
        $region49: #{tpu_custom_call.1} parent=39 // pred_check
          %p395 = pneg %p178
        $region50: #{tpu_custom_call.1} parent=39 // pred_check_branch
          %397 = sbr.rel (%p395) target = $region52
        $region51: #{tpu_custom_call.1} parent=39 // pred_region
          %398 = dma.done %s391, 12288
        $region52: #{tpu_custom_call.1} parent=39 // pred_fallthru
          _
        %s399 = sand.u32 %s197, 1
        %s400 = scalar_lea.sflag [#allocation13], %s399
        %s401 = sand.u32 %s197, 1
        %s402 = smul.addr %s401, 2
        %s403 = scalar_lea.vmem [#allocation12], %s402
        // Predicated region
        $region53: #{tpu_custom_call.1} parent=39 // pred_check
          %p404 = pneg %p210
        $region54: #{tpu_custom_call.1} parent=39 // pred_check_branch
          %406 = sbr.rel (%p404) target = $region56
        $region55: #{tpu_custom_call.1} parent=39 // pred_region
          %407 = dma.done %s400, 32
        $region56: #{tpu_custom_call.1} parent=39 // pred_fallthru
          _
        %s408 = smul.u32 16, %s41
        %p409 = scmp.lt.s32.totalorder %s408, 31
        %s410 = scalar_select %p409, %s408, 31
        %s411 = smul.addr %s410, 8
        %s412 = scalar_lea.vmem %s2, %s411
        %p413 = pneg %p76
        %p414 = pneg %p73
        %s415 = sand.u32 %s89, 1
        %s416 = scalar_lea.sflag [#allocation7], %s415
        %s417 = sand.u32 %s89, 1
        %s418 = smul.addr %s417, 256
        %s419 = scalar_lea.vmem [#allocation6], %s418
        %p420 = pneg %p102
        %p421 = pneg %p99
        %s422 = sand.u32 %s36, 1
        %s423 = scalar_lea.sflag [#allocation10], %s422
        %s424 = sand.u32 %s127, 1
        %s425 = smul.addr %s424, 1536
        %s426 = scalar_lea.vmem [#allocation9], %s425
        %p427 = pneg %p140
        %p428 = pneg %p137
        %s429 = sand.u32 %s36, 1
        %s430 = scalar_lea.sflag [#allocation10], %s429
        %s431 = sand.u32 %s165, 1
        %s432 = smul.addr %s431, 768
        %s433 = scalar_lea.vmem [#allocation11], %s432
        %p434 = pneg %p178
        %p435 = pneg %p175
        %s436 = sand.u32 %s197, 1
        %s437 = scalar_lea.sflag [#allocation13], %s436
        %s438 = sand.u32 %s197, 1
        %s439 = smul.addr %s438, 2
        %s440 = scalar_lea.vmem [#allocation12], %s439
        %p441 = pneg %p210
        %p442 = pneg %p207
        %p443 = pneg %p236
        %p444 = pneg %p233
        %s445 = sand.u32 %s223, 1
        %s446 = scalar_lea.sflag [#allocation8], %s445
        %s447 = sand.u32 %s223, 1
        %s448 = smul.addr %s447, 256
        %s449 = scalar_lea.vmem [#allocation14], %s448
        %s450 = smul.u32 16, %s41
        %p451 = scmp.lt.s32.totalorder %s450, 31
        %s452 = scalar_select %p451, %s450, 31
        %s453 = smul.addr %s452, 8
        %s454 = scalar_lea.vmem %s2, %s453
        %s455 = smul.u32 16, %s41
        %s456 = smul.u32 16, %s41
        %s457 = smul.u32 %s41, 2
        %s458 = sadd.s32 %s457, %s42
        %s459 = sld [smem:[#allocation4 + %s458]]
        %s460 = sld [smem:[#allocation5 + %s458]]
        %s461 = smul.u32 %s43, %s459
        %s462 = smul.u32 6, %s461
        %s463 = smul.u32 %s41, 2
        %s464 = sadd.s32 %s463, %s42
        %s465 = sld [smem:[#allocation4 + %s464]]
        %s466 = sld [smem:[#allocation5 + %s464]]
        %s467 = smul.u32 %s43, %s465
        %s468 = smul.u32 48, %s467
        %s469 = smul.u32 %s41, 2
        %s470 = sadd.s32 %s469, %s42
        %s471 = sld [smem:[#allocation5 + %s470]]
        %s472 = smul.u32 16, %s41
        %s473 = smul.u32 %s41, 2
        %s474 = sadd.s32 %s473, %s42
        %s475 = sld [smem:[#allocation4 + %s474]]
        %p476 = scmp.eq.s32.totalorder %s42, 0
        %p477 = scmp.eq.s32.totalorder %s43, 0
        %p478 = pnand %p476, %p477
        %p479 = pneg %p478
        // Predicated region
        $region57: #{tpu_custom_call.1} parent=39 // pred_check
          _
        $region58: #{tpu_custom_call.1} parent=39 // pred_check_branch
          %481 = sbr.rel (%p478) target = $region60
        $region59: #{tpu_custom_call.1} parent=39 // pred_region
          %482 = vst [vmem:[%s449] sm:$0xff] 0.0
          %483 = vst [vmem:[%s449 + $0x8] sm:$0xff] 0.0
          %484 = vst [vmem:[%s449 + $0x10] sm:$0xff] 0.0
          %485 = vst [vmem:[%s449 + $0x18] sm:$0xff] 0.0
          %486 = vst [vmem:[%s449 + $0x20] sm:$0xff] 0.0
          %487 = vst [vmem:[%s449 + $0x28] sm:$0xff] 0.0
          %488 = vst [vmem:[%s449 + $0x30] sm:$0xff] 0.0
          %489 = vst [vmem:[%s449 + $0x38] sm:$0xff] 0.0
          %490 = vst [vmem:[%s449 + $0x40] sm:$0xff] 0.0
          %491 = vst [vmem:[%s449 + $0x48] sm:$0xff] 0.0
          %492 = vst [vmem:[%s449 + $0x50] sm:$0xff] 0.0
          %493 = vst [vmem:[%s449 + $0x58] sm:$0xff] 0.0
          %494 = vst [vmem:[%s449 + $0x60] sm:$0xff] 0.0
          %495 = vst [vmem:[%s449 + $0x68] sm:$0xff] 0.0
          %496 = vst [vmem:[%s449 + $0x70] sm:$0xff] 0.0
          %497 = vst [vmem:[%s449 + $0x78] sm:$0xff] 0.0
          %498 = vst [vmem:[%s449 + $0x80] sm:$0xff] 0.0
          %499 = vst [vmem:[%s449 + $0x88] sm:$0xff] 0.0
          %500 = vst [vmem:[%s449 + $0x90] sm:$0xff] 0.0
          %501 = vst [vmem:[%s449 + $0x98] sm:$0xff] 0.0
          %502 = vst [vmem:[%s449 + $0xa0] sm:$0xff] 0.0
          %503 = vst [vmem:[%s449 + $0xa8] sm:$0xff] 0.0
          %504 = vst [vmem:[%s449 + $0xb0] sm:$0xff] 0.0
          %505 = vst [vmem:[%s449 + $0xb8] sm:$0xff] 0.0
          %506 = vst [vmem:[%s449 + $0xc0] sm:$0xff] 0.0
          %507 = vst [vmem:[%s449 + $0xc8] sm:$0xff] 0.0
          %508 = vst [vmem:[%s449 + $0xd0] sm:$0xff] 0.0
          %509 = vst [vmem:[%s449 + $0xd8] sm:$0xff] 0.0
          %510 = vst [vmem:[%s449 + $0xe0] sm:$0xff] 0.0
          %511 = vst [vmem:[%s449 + $0xe8] sm:$0xff] 0.0
          %512 = vst [vmem:[%s449 + $0xf0] sm:$0xff] 0.0
          %513 = vst [vmem:[%s449 + $0xf8] sm:$0xff] 0.0
        $region60: #{tpu_custom_call.1} parent=39 // pred_fallthru
          _
        %p514 = scmp.ne.s32.totalorder %s475, 0
        // Predicated region
        $region61: #{tpu_custom_call.1} parent=39 // pred_check
          %p515 = pneg %p514
        $region62: #{tpu_custom_call.1} parent=39 // pred_check_branch
          %517 = sbr.rel (%p515) target = $region64
        $region63: #{tpu_custom_call.1} parent=39 // pred_region
          %v518 = vld [vmem:[%s376] sm:$0xff]
          %v519 = vld [vmem:[%s376 + $0x8] sm:$0xff]
          %v520 = vld [vmem:[%s376 + $0x10] sm:$0xff]
          %v521 = vld [vmem:[%s376 + $0x18] sm:$0xff]
          %v522 = vld [vmem:[%s376 + $0x20] sm:$0xff]
          %v523 = vld [vmem:[%s376 + $0x28] sm:$0xff]
          %v524 = vld [vmem:[%s376 + $0x30] sm:$0xff]
          %v525 = vld [vmem:[%s376 + $0x38] sm:$0xff]
          %v526 = vld [vmem:[%s376 + $0x40] sm:$0xff]
          %v527 = vld [vmem:[%s376 + $0x48] sm:$0xff]
          %v528 = vld [vmem:[%s376 + $0x50] sm:$0xff]
          %v529 = vld [vmem:[%s376 + $0x58] sm:$0xff]
          %v530 = vld [vmem:[%s376 + $0x60] sm:$0xff]
          %v531 = vld [vmem:[%s376 + $0x68] sm:$0xff]
          %v532 = vld [vmem:[%s376 + $0x70] sm:$0xff]
          %v533 = vld [vmem:[%s376 + $0x78] sm:$0xff]
          %v534 = vld [vmem:[%s376 + $0x80] sm:$0xff]
          %v535 = vld [vmem:[%s376 + $0x88] sm:$0xff]
          %v536 = vld [vmem:[%s376 + $0x90] sm:$0xff]
          %v537 = vld [vmem:[%s376 + $0x98] sm:$0xff]
          %v538 = vld [vmem:[%s376 + $0xa0] sm:$0xff]
          %v539 = vld [vmem:[%s376 + $0xa8] sm:$0xff]
          %v540 = vld [vmem:[%s376 + $0xb0] sm:$0xff]
          %v541 = vld [vmem:[%s376 + $0xb8] sm:$0xff]
          %v542 = vld [vmem:[%s376 + $0xc0] sm:$0xff]
          %v543 = vld [vmem:[%s376 + $0xc8] sm:$0xff]
          %v544 = vld [vmem:[%s376 + $0xd0] sm:$0xff]
          %v545 = vld [vmem:[%s376 + $0xd8] sm:$0xff]
          %v546 = vld [vmem:[%s376 + $0xe0] sm:$0xff]
          %v547 = vld [vmem:[%s376 + $0xe8] sm:$0xff]
          %v548 = vld [vmem:[%s376 + $0xf0] sm:$0xff]
          %v549 = vld [vmem:[%s376 + $0xf8] sm:$0xff]
          %v550 = vld [vmem:[%s385] sm:$0xff]
          %v551 = vld [vmem:[%s385 + $0x8] sm:$0xff]
          %v552 = vld [vmem:[%s385 + $0x10] sm:$0xff]
          %v553 = vld [vmem:[%s385 + $0x18] sm:$0xff]
          %v554 = vld [vmem:[%s385 + $0x20] sm:$0xff]
          %v555 = vld [vmem:[%s385 + $0x28] sm:$0xff]
          %v556 = vld [vmem:[%s385 + $0x30] sm:$0xff]
          %v557 = vld [vmem:[%s385 + $0x38] sm:$0xff]
          %v558 = vld [vmem:[%s385 + $0x40] sm:$0xff]
          %v559 = vld [vmem:[%s385 + $0x48] sm:$0xff]
          %v560 = vld [vmem:[%s385 + $0x50] sm:$0xff]
          %v561 = vld [vmem:[%s385 + $0x58] sm:$0xff]
          %v562 = vld [vmem:[%s385 + $0x60] sm:$0xff]
          %v563 = vld [vmem:[%s385 + $0x68] sm:$0xff]
          %v564 = vld [vmem:[%s385 + $0x70] sm:$0xff]
          %v565 = vld [vmem:[%s385 + $0x78] sm:$0xff]
          %v566 = vld [vmem:[%s385 + $0x80] sm:$0xff]
          %v567 = vld [vmem:[%s385 + $0x88] sm:$0xff]
          %v568 = vld [vmem:[%s385 + $0x90] sm:$0xff]
          %v569 = vld [vmem:[%s385 + $0x98] sm:$0xff]
          %v570 = vld [vmem:[%s385 + $0xa0] sm:$0xff]
          %v571 = vld [vmem:[%s385 + $0xa8] sm:$0xff]
          %v572 = vld [vmem:[%s385 + $0xb0] sm:$0xff]
          %v573 = vld [vmem:[%s385 + $0xb8] sm:$0xff]
          %v574 = vld [vmem:[%s385 + $0xc0] sm:$0xff]
          %v575 = vld [vmem:[%s385 + $0xc8] sm:$0xff]
          %v576 = vld [vmem:[%s385 + $0xd0] sm:$0xff]
          %v577 = vld [vmem:[%s385 + $0xd8] sm:$0xff]
          %v578 = vld [vmem:[%s385 + $0xe0] sm:$0xff]
          %v579 = vld [vmem:[%s385 + $0xe8] sm:$0xff]
          %v580 = vld [vmem:[%s385 + $0xf0] sm:$0xff]
          %v581 = vld [vmem:[%s385 + $0xf8] sm:$0xff]
          %v582 = vld [vmem:[%s385 + $0x100] sm:$0xff]
          %v583 = vld [vmem:[%s385 + $0x108] sm:$0xff]
          %v584 = vld [vmem:[%s385 + $0x110] sm:$0xff]
          %v585 = vld [vmem:[%s385 + $0x118] sm:$0xff]
          %v586 = vld [vmem:[%s385 + $0x120] sm:$0xff]
          %v587 = vld [vmem:[%s385 + $0x128] sm:$0xff]
          %v588 = vld [vmem:[%s385 + $0x130] sm:$0xff]
          %v589 = vld [vmem:[%s385 + $0x138] sm:$0xff]
          %v590 = vld [vmem:[%s385 + $0x140] sm:$0xff]
          %v591 = vld [vmem:[%s385 + $0x148] sm:$0xff]
          %v592 = vld [vmem:[%s385 + $0x150] sm:$0xff]
          %v593 = vld [vmem:[%s385 + $0x158] sm:$0xff]
          %v594 = vld [vmem:[%s385 + $0x160] sm:$0xff]
          %v595 = vld [vmem:[%s385 + $0x168] sm:$0xff]
          %v596 = vld [vmem:[%s385 + $0x170] sm:$0xff]
          %v597 = vld [vmem:[%s385 + $0x178] sm:$0xff]
          %v598 = vld [vmem:[%s385 + $0x180] sm:$0xff]
          %v599 = vld [vmem:[%s385 + $0x188] sm:$0xff]
          %v600 = vld [vmem:[%s385 + $0x190] sm:$0xff]
          %v601 = vld [vmem:[%s385 + $0x198] sm:$0xff]
          %v602 = vld [vmem:[%s385 + $0x1a0] sm:$0xff]
          %v603 = vld [vmem:[%s385 + $0x1a8] sm:$0xff]
          %v604 = vld [vmem:[%s385 + $0x1b0] sm:$0xff]
          %v605 = vld [vmem:[%s385 + $0x1b8] sm:$0xff]
          %v606 = vld [vmem:[%s385 + $0x1c0] sm:$0xff]
          %v607 = vld [vmem:[%s385 + $0x1c8] sm:$0xff]
          %v608 = vld [vmem:[%s385 + $0x1d0] sm:$0xff]
          %v609 = vld [vmem:[%s385 + $0x1d8] sm:$0xff]
          %v610 = vld [vmem:[%s385 + $0x1e0] sm:$0xff]
          %v611 = vld [vmem:[%s385 + $0x1e8] sm:$0xff]
          %v612 = vld [vmem:[%s385 + $0x1f0] sm:$0xff]
          %v613 = vld [vmem:[%s385 + $0x1f8] sm:$0xff]
          %v614 = vld [vmem:[%s385 + $0x200] sm:$0xff]
          %v615 = vld [vmem:[%s385 + $0x208] sm:$0xff]
          %v616 = vld [vmem:[%s385 + $0x210] sm:$0xff]
          %v617 = vld [vmem:[%s385 + $0x218] sm:$0xff]
          %v618 = vld [vmem:[%s385 + $0x220] sm:$0xff]
          %v619 = vld [vmem:[%s385 + $0x228] sm:$0xff]
          %v620 = vld [vmem:[%s385 + $0x230] sm:$0xff]
          %v621 = vld [vmem:[%s385 + $0x238] sm:$0xff]
          %v622 = vld [vmem:[%s385 + $0x240] sm:$0xff]
          %v623 = vld [vmem:[%s385 + $0x248] sm:$0xff]
          %v624 = vld [vmem:[%s385 + $0x250] sm:$0xff]
          %v625 = vld [vmem:[%s385 + $0x258] sm:$0xff]
          %v626 = vld [vmem:[%s385 + $0x260] sm:$0xff]
          %v627 = vld [vmem:[%s385 + $0x268] sm:$0xff]
          %v628 = vld [vmem:[%s385 + $0x270] sm:$0xff]
          %v629 = vld [vmem:[%s385 + $0x278] sm:$0xff]
          %v630 = vld [vmem:[%s385 + $0x280] sm:$0xff]
          %v631 = vld [vmem:[%s385 + $0x288] sm:$0xff]
          %v632 = vld [vmem:[%s385 + $0x290] sm:$0xff]
          %v633 = vld [vmem:[%s385 + $0x298] sm:$0xff]
          %v634 = vld [vmem:[%s385 + $0x2a0] sm:$0xff]
          %v635 = vld [vmem:[%s385 + $0x2a8] sm:$0xff]
          %v636 = vld [vmem:[%s385 + $0x2b0] sm:$0xff]
          %v637 = vld [vmem:[%s385 + $0x2b8] sm:$0xff]
          %v638 = vld [vmem:[%s385 + $0x2c0] sm:$0xff]
          %v639 = vld [vmem:[%s385 + $0x2c8] sm:$0xff]
          %v640 = vld [vmem:[%s385 + $0x2d0] sm:$0xff]
          %v641 = vld [vmem:[%s385 + $0x2d8] sm:$0xff]
          %v642 = vld [vmem:[%s385 + $0x2e0] sm:$0xff]
          %v643 = vld [vmem:[%s385 + $0x2e8] sm:$0xff]
          %v644 = vld [vmem:[%s385 + $0x2f0] sm:$0xff]
          %v645 = vld [vmem:[%s385 + $0x2f8] sm:$0xff]
          %v646 = vld [vmem:[%s385 + $0x300] sm:$0xff]
          %v647 = vld [vmem:[%s385 + $0x308] sm:$0xff]
          %v648 = vld [vmem:[%s385 + $0x310] sm:$0xff]
          %v649 = vld [vmem:[%s385 + $0x318] sm:$0xff]
          %v650 = vld [vmem:[%s385 + $0x320] sm:$0xff]
          %v651 = vld [vmem:[%s385 + $0x328] sm:$0xff]
          %v652 = vld [vmem:[%s385 + $0x330] sm:$0xff]
          %v653 = vld [vmem:[%s385 + $0x338] sm:$0xff]
          %v654 = vld [vmem:[%s385 + $0x340] sm:$0xff]
          %v655 = vld [vmem:[%s385 + $0x348] sm:$0xff]
          %v656 = vld [vmem:[%s385 + $0x350] sm:$0xff]
          %v657 = vld [vmem:[%s385 + $0x358] sm:$0xff]
          %v658 = vld [vmem:[%s385 + $0x360] sm:$0xff]
          %v659 = vld [vmem:[%s385 + $0x368] sm:$0xff]
          %v660 = vld [vmem:[%s385 + $0x370] sm:$0xff]
          %v661 = vld [vmem:[%s385 + $0x378] sm:$0xff]
          %v662 = vld [vmem:[%s385 + $0x380] sm:$0xff]
          %v663 = vld [vmem:[%s385 + $0x388] sm:$0xff]
          %v664 = vld [vmem:[%s385 + $0x390] sm:$0xff]
          %v665 = vld [vmem:[%s385 + $0x398] sm:$0xff]
          %v666 = vld [vmem:[%s385 + $0x3a0] sm:$0xff]
          %v667 = vld [vmem:[%s385 + $0x3a8] sm:$0xff]
          %v668 = vld [vmem:[%s385 + $0x3b0] sm:$0xff]
          %v669 = vld [vmem:[%s385 + $0x3b8] sm:$0xff]
          %v670 = vld [vmem:[%s385 + $0x3c0] sm:$0xff]
          %v671 = vld [vmem:[%s385 + $0x3c8] sm:$0xff]
          %v672 = vld [vmem:[%s385 + $0x3d0] sm:$0xff]
          %v673 = vld [vmem:[%s385 + $0x3d8] sm:$0xff]
          %v674 = vld [vmem:[%s385 + $0x3e0] sm:$0xff]
          %v675 = vld [vmem:[%s385 + $0x3e8] sm:$0xff]
          %v676 = vld [vmem:[%s385 + $0x3f0] sm:$0xff]
          %v677 = vld [vmem:[%s385 + $0x3f8] sm:$0xff]
          %v678 = vld [vmem:[%s385 + $0x400] sm:$0xff]
          %v679 = vld [vmem:[%s385 + $0x408] sm:$0xff]
          %v680 = vld [vmem:[%s385 + $0x410] sm:$0xff]
          %v681 = vld [vmem:[%s385 + $0x418] sm:$0xff]
          %v682 = vld [vmem:[%s385 + $0x420] sm:$0xff]
          %v683 = vld [vmem:[%s385 + $0x428] sm:$0xff]
          %v684 = vld [vmem:[%s385 + $0x430] sm:$0xff]
          %v685 = vld [vmem:[%s385 + $0x438] sm:$0xff]
          %v686 = vld [vmem:[%s385 + $0x440] sm:$0xff]
          %v687 = vld [vmem:[%s385 + $0x448] sm:$0xff]
          %v688 = vld [vmem:[%s385 + $0x450] sm:$0xff]
          %v689 = vld [vmem:[%s385 + $0x458] sm:$0xff]
          %v690 = vld [vmem:[%s385 + $0x460] sm:$0xff]
          %v691 = vld [vmem:[%s385 + $0x468] sm:$0xff]
          %v692 = vld [vmem:[%s385 + $0x470] sm:$0xff]
          %v693 = vld [vmem:[%s385 + $0x478] sm:$0xff]
          %v694 = vld [vmem:[%s385 + $0x480] sm:$0xff]
          %v695 = vld [vmem:[%s385 + $0x488] sm:$0xff]
          %v696 = vld [vmem:[%s385 + $0x490] sm:$0xff]
          %v697 = vld [vmem:[%s385 + $0x498] sm:$0xff]
          %v698 = vld [vmem:[%s385 + $0x4a0] sm:$0xff]
          %v699 = vld [vmem:[%s385 + $0x4a8] sm:$0xff]
          %v700 = vld [vmem:[%s385 + $0x4b0] sm:$0xff]
          %v701 = vld [vmem:[%s385 + $0x4b8] sm:$0xff]
          %v702 = vld [vmem:[%s385 + $0x4c0] sm:$0xff]
          %v703 = vld [vmem:[%s385 + $0x4c8] sm:$0xff]
          %v704 = vld [vmem:[%s385 + $0x4d0] sm:$0xff]
          %v705 = vld [vmem:[%s385 + $0x4d8] sm:$0xff]
          %v706 = vld [vmem:[%s385 + $0x4e0] sm:$0xff]
          %v707 = vld [vmem:[%s385 + $0x4e8] sm:$0xff]
          %v708 = vld [vmem:[%s385 + $0x4f0] sm:$0xff]
          %v709 = vld [vmem:[%s385 + $0x4f8] sm:$0xff]
          %v710 = vld [vmem:[%s385 + $0x500] sm:$0xff]
          %v711 = vld [vmem:[%s385 + $0x508] sm:$0xff]
          %v712 = vld [vmem:[%s385 + $0x510] sm:$0xff]
          %v713 = vld [vmem:[%s385 + $0x518] sm:$0xff]
          %v714 = vld [vmem:[%s385 + $0x520] sm:$0xff]
          %v715 = vld [vmem:[%s385 + $0x528] sm:$0xff]
          %v716 = vld [vmem:[%s385 + $0x530] sm:$0xff]
          %v717 = vld [vmem:[%s385 + $0x538] sm:$0xff]
          %v718 = vld [vmem:[%s385 + $0x540] sm:$0xff]
          %v719 = vld [vmem:[%s385 + $0x548] sm:$0xff]
          %v720 = vld [vmem:[%s385 + $0x550] sm:$0xff]
          %v721 = vld [vmem:[%s385 + $0x558] sm:$0xff]
          %v722 = vld [vmem:[%s385 + $0x560] sm:$0xff]
          %v723 = vld [vmem:[%s385 + $0x568] sm:$0xff]
          %v724 = vld [vmem:[%s385 + $0x570] sm:$0xff]
          %v725 = vld [vmem:[%s385 + $0x578] sm:$0xff]
          %v726 = vld [vmem:[%s385 + $0x580] sm:$0xff]
          %v727 = vld [vmem:[%s385 + $0x588] sm:$0xff]
          %v728 = vld [vmem:[%s385 + $0x590] sm:$0xff]
          %v729 = vld [vmem:[%s385 + $0x598] sm:$0xff]
          %v730 = vld [vmem:[%s385 + $0x5a0] sm:$0xff]
          %v731 = vld [vmem:[%s385 + $0x5a8] sm:$0xff]
          %v732 = vld [vmem:[%s385 + $0x5b0] sm:$0xff]
          %v733 = vld [vmem:[%s385 + $0x5b8] sm:$0xff]
          %v734 = vld [vmem:[%s385 + $0x5c0] sm:$0xff]
          %v735 = vld [vmem:[%s385 + $0x5c8] sm:$0xff]
          %v736 = vld [vmem:[%s385 + $0x5d0] sm:$0xff]
          %v737 = vld [vmem:[%s385 + $0x5d8] sm:$0xff]
          %v738 = vld [vmem:[%s385 + $0x5e0] sm:$0xff]
          %v739 = vld [vmem:[%s385 + $0x5e8] sm:$0xff]
          %v740 = vld [vmem:[%s385 + $0x5f0] sm:$0xff]
          %v741 = vld [vmem:[%s385 + $0x5f8] sm:$0xff]
          %742 = vmatprep.subr.mxu0 %v551
          %743 = vmatpush1.msra.mxu0 %v550
          %744 = vmatprep.subr.mxu0 %v557
          %745 = vmatpush1.msra.mxu0 %v556
          %746 = vmatprep.subr.mxu0 %v563
          %747 = vmatpush1.msra.mxu0 %v562
          %748 = vmatprep.subr.mxu0 %v569
          %749 = vmatpush1.msra.mxu0 %v568
          %750 = vmatprep.subr.mxu0 %v575
          %751 = vmatpush1.msra.mxu0 %v574
          %752 = vmatprep.subr.mxu0 %v581
          %753 = vmatpush1.msra.mxu0 %v580
          %754 = vmatprep.subr.mxu0 %v587
          %755 = vmatpush1.msra.mxu0 %v586
          %756 = vmatprep.subr.mxu0 %v593
          %757 = vmatpush1.msra.mxu0 %v592
          %758 = vmatprep.subr.mxu0 %v599
          %759 = vmatpush1.msra.mxu0 %v598
          %760 = vmatprep.subr.mxu0 %v605
          %761 = vmatpush1.msra.mxu0 %v604
          %762 = vmatprep.subr.mxu0 %v611
          %763 = vmatpush1.msra.mxu0 %v610
          %764 = vmatprep.subr.mxu0 %v617
          %765 = vmatpush1.msra.mxu0 %v616
          %766 = vmatprep.subr.mxu0 %v623
          %767 = vmatpush1.msra.mxu0 %v622
          %768 = vmatprep.subr.mxu0 %v629
          %769 = vmatpush1.msra.mxu0 %v628
          %770 = vmatprep.subr.mxu0 %v635
          %771 = vmatpush1.msra.mxu0 %v634
          %772 = vmatprep.subr.mxu0 %v641
          %773 = vmatpush1.msra.mxu0 %v640
          %774 = vmatprep.subr.mxu0 %v647
          %775 = vmatpush1.msra.mxu0 %v646
          %776 = vmatprep.subr.mxu0 %v653
          %777 = vmatpush1.msra.mxu0 %v652
          %778 = vmatprep.subr.mxu0 %v659
          %779 = vmatpush1.msra.mxu0 %v658
          %780 = vmatprep.subr.mxu0 %v665
          %781 = vmatpush1.msra.mxu0 %v664
          %782 = vmatprep.subr.mxu0 %v671
          %783 = vmatpush1.msra.mxu0 %v670
          %784 = vmatprep.subr.mxu0 %v677
          %785 = vmatpush1.msra.mxu0 %v676
          %786 = vmatprep.subr.mxu0 %v683
          %787 = vmatpush1.msra.mxu0 %v682
          %788 = vmatprep.subr.mxu0 %v689
          %789 = vmatpush1.msra.mxu0 %v688
          %790 = vmatprep.subr.mxu0 %v695
          %791 = vmatpush1.msra.mxu0 %v694
          %792 = vmatprep.subr.mxu0 %v701
          %793 = vmatpush1.msra.mxu0 %v700
          %794 = vmatprep.subr.mxu0 %v707
          %795 = vmatpush1.msra.mxu0 %v706
          %796 = vmatprep.subr.mxu0 %v713
          %797 = vmatpush1.msra.mxu0 %v712
          %798 = vmatprep.subr.mxu0 %v719
          %799 = vmatpush1.msra.mxu0 %v718
          %800 = vmatprep.subr.mxu0 %v725
          %801 = vmatpush1.msra.mxu0 %v724
          %802 = vmatprep.subr.mxu0 %v731
          %803 = vmatpush1.msra.mxu0 %v730
          %804 = vmatprep.subr.mxu0 %v737
          %805 = vmatpush1.msra.mxu0 %v736
          %806 = vmatprep.mubr.f32.mxu0 %v519
          %807 = vmatmul.mubr.f32.gmra.mrb[0].mxu0 %v518
          %v808 = vpop.f32.mrb[0].mxu0
          %v809 = vadd.f32 0.0, %v808
          %v810 = vpop.f32.mrb[0].mxu0
          %v811 = vadd.f32 0.0, %v810
          %812 = vmatprep.mubr.f32.mxu0 %v521
          %813 = vmatmul.mubr.f32.gmra.mrb[0].mxu0 %v520
          %v814 = vpop.f32.mrb[0].mxu0
          %v815 = vadd.f32 0.0, %v814
          %v816 = vpop.f32.mrb[0].mxu0
          %v817 = vadd.f32 0.0, %v816
          %818 = vmatprep.mubr.f32.mxu0 %v523
          %819 = vmatmul.mubr.f32.gmra.mrb[0].mxu0 %v522
          %v820 = vpop.f32.mrb[0].mxu0
          %v821 = vadd.f32 0.0, %v820
          %v822 = vpop.f32.mrb[0].mxu0
          %v823 = vadd.f32 0.0, %v822
          %824 = vmatprep.mubr.f32.mxu0 %v525
          %825 = vmatmul.mubr.f32.gmra.mrb[0].mxu0 %v524
          %v826 = vpop.f32.mrb[0].mxu0
          %v827 = vadd.f32 0.0, %v826
          %v828 = vpop.f32.mrb[0].mxu0
          %v829 = vadd.f32 0.0, %v828
          %830 = vmatprep.mubr.f32.mxu0 %v527
          %831 = vmatmul.mubr.f32.gmra.mrb[0].mxu0 %v526
          %v832 = vpop.f32.mrb[0].mxu0
          %v833 = vadd.f32 0.0, %v832
          %v834 = vpop.f32.mrb[0].mxu0
          %v835 = vadd.f32 0.0, %v834
          %836 = vmatprep.mubr.f32.mxu0 %v529
          %837 = vmatmul.mubr.f32.gmra.mrb[0].mxu0 %v528
          %v838 = vpop.f32.mrb[0].mxu0
          %v839 = vadd.f32 0.0, %v838
          %v840 = vpop.f32.mrb[0].mxu0
          %v841 = vadd.f32 0.0, %v840
          %842 = vmatprep.mubr.f32.mxu0 %v531
          %843 = vmatmul.mubr.f32.gmra.mrb[0].mxu0 %v530
          %v844 = vpop.f32.mrb[0].mxu0
          %v845 = vadd.f32 0.0, %v844
          %v846 = vpop.f32.mrb[0].mxu0
          %v847 = vadd.f32 0.0, %v846
          %848 = vmatprep.mubr.f32.mxu0 %v533
          %849 = vmatmul.mubr.f32.gmra.mrb[0].mxu0 %v532
          %v850 = vpop.f32.mrb[0].mxu0
          %v851 = vadd.f32 0.0, %v850
          %v852 = vpop.f32.mrb[0].mxu0
          %v853 = vadd.f32 0.0, %v852
          %854 = vmatprep.mubr.f32.mxu0 %v535
          %855 = vmatmul.mubr.f32.gmra.mrb[0].mxu0 %v534
          %v856 = vpop.f32.mrb[0].mxu0
          %v857 = vadd.f32 0.0, %v856
          %v858 = vpop.f32.mrb[0].mxu0
          %v859 = vadd.f32 0.0, %v858
          %860 = vmatprep.mubr.f32.mxu0 %v537
          %861 = vmatmul.mubr.f32.gmra.mrb[0].mxu0 %v536
          %v862 = vpop.f32.mrb[0].mxu0
          %v863 = vadd.f32 0.0, %v862
          %v864 = vpop.f32.mrb[0].mxu0
          %v865 = vadd.f32 0.0, %v864
          %866 = vmatprep.mubr.f32.mxu0 %v539
          %867 = vmatmul.mubr.f32.gmra.mrb[0].mxu0 %v538
          %v868 = vpop.f32.mrb[0].mxu0
          %v869 = vadd.f32 0.0, %v868
          %v870 = vpop.f32.mrb[0].mxu0
          %v871 = vadd.f32 0.0, %v870
          %872 = vmatprep.mubr.f32.mxu0 %v541
          %873 = vmatmul.mubr.f32.gmra.mrb[0].mxu0 %v540
          %v874 = vpop.f32.mrb[0].mxu0
          %v875 = vadd.f32 0.0, %v874
          %v876 = vpop.f32.mrb[0].mxu0
          %v877 = vadd.f32 0.0, %v876
          %878 = vmatprep.mubr.f32.mxu0 %v543
          %879 = vmatmul.mubr.f32.gmra.mrb[0].mxu0 %v542
          %v880 = vpop.f32.mrb[0].mxu0
          %v881 = vadd.f32 0.0, %v880
          %v882 = vpop.f32.mrb[0].mxu0
          %v883 = vadd.f32 0.0, %v882
          %884 = vmatprep.mubr.f32.mxu0 %v545
          %885 = vmatmul.mubr.f32.gmra.mrb[0].mxu0 %v544
          %v886 = vpop.f32.mrb[0].mxu0
          %v887 = vadd.f32 0.0, %v886
          %v888 = vpop.f32.mrb[0].mxu0
          %v889 = vadd.f32 0.0, %v888
          %890 = vmatprep.mubr.f32.mxu0 %v547
          %891 = vmatmul.mubr.f32.gmra.mrb[0].mxu0 %v546
          %v892 = vpop.f32.mrb[0].mxu0
          %v893 = vadd.f32 0.0, %v892
          %v894 = vpop.f32.mrb[0].mxu0
          %v895 = vadd.f32 0.0, %v894
          %896 = vmatprep.mubr.f32.mxu0 %v549
          %897 = vmatmul.mubr.f32.gmra.mrb[0].mxu0 %v548
          %v898 = vpop.f32.mrb[0].mxu0
          %v899 = vadd.f32 0.0, %v898
          %v900 = vpop.f32.mrb[0].mxu0
          %v901 = vadd.f32 0.0, %v900
          %902 = vdwg.mxu0
          %903 = vmatprep.subr.mxu0 %v553
          %904 = vmatpush1.msra.mxu0 %v552
          %905 = vmatprep.subr.mxu0 %v559
          %906 = vmatpush1.msra.mxu0 %v558
          %907 = vmatprep.subr.mxu0 %v565
          %908 = vmatpush1.msra.mxu0 %v564
          %909 = vmatprep.subr.mxu0 %v571
          %910 = vmatpush1.msra.mxu0 %v570
          %911 = vmatprep.subr.mxu0 %v577
          %912 = vmatpush1.msra.mxu0 %v576
          %913 = vmatprep.subr.mxu0 %v583
          %914 = vmatpush1.msra.mxu0 %v582
          %915 = vmatprep.subr.mxu0 %v589
          %916 = vmatpush1.msra.mxu0 %v588
          %917 = vmatprep.subr.mxu0 %v595
          %918 = vmatpush1.msra.mxu0 %v594
          %919 = vmatprep.subr.mxu0 %v601
          %920 = vmatpush1.msra.mxu0 %v600
          %921 = vmatprep.subr.mxu0 %v607
          %922 = vmatpush1.msra.mxu0 %v606
          %923 = vmatprep.subr.mxu0 %v613
          %924 = vmatpush1.msra.mxu0 %v612
          %925 = vmatprep.subr.mxu0 %v619
          %926 = vmatpush1.msra.mxu0 %v618
          %927 = vmatprep.subr.mxu0 %v625
          %928 = vmatpush1.msra.mxu0 %v624
          %929 = vmatprep.subr.mxu0 %v631
          %930 = vmatpush1.msra.mxu0 %v630
          %931 = vmatprep.subr.mxu0 %v637
          %932 = vmatpush1.msra.mxu0 %v636
          %933 = vmatprep.subr.mxu0 %v643
          %934 = vmatpush1.msra.mxu0 %v642
          %935 = vmatprep.subr.mxu0 %v649
          %936 = vmatpush1.msra.mxu0 %v648
          %937 = vmatprep.subr.mxu0 %v655
          %938 = vmatpush1.msra.mxu0 %v654
          %939 = vmatprep.subr.mxu0 %v661
          %940 = vmatpush1.msra.mxu0 %v660
          %941 = vmatprep.subr.mxu0 %v667
          %942 = vmatpush1.msra.mxu0 %v666
          %943 = vmatprep.subr.mxu0 %v673
          %944 = vmatpush1.msra.mxu0 %v672
          %945 = vmatprep.subr.mxu0 %v679
          %946 = vmatpush1.msra.mxu0 %v678
          %947 = vmatprep.subr.mxu0 %v685
          %948 = vmatpush1.msra.mxu0 %v684
          %949 = vmatprep.subr.mxu0 %v691
          %950 = vmatpush1.msra.mxu0 %v690
          %951 = vmatprep.subr.mxu0 %v697
          %952 = vmatpush1.msra.mxu0 %v696
          %953 = vmatprep.subr.mxu0 %v703
          %954 = vmatpush1.msra.mxu0 %v702
          %955 = vmatprep.subr.mxu0 %v709
          %956 = vmatpush1.msra.mxu0 %v708
          %957 = vmatprep.subr.mxu0 %v715
          %958 = vmatpush1.msra.mxu0 %v714
          %959 = vmatprep.subr.mxu0 %v721
          %960 = vmatpush1.msra.mxu0 %v720
          %961 = vmatprep.subr.mxu0 %v727
          %962 = vmatpush1.msra.mxu0 %v726
          %963 = vmatprep.subr.mxu0 %v733
          %964 = vmatpush1.msra.mxu0 %v732
          %965 = vmatprep.subr.mxu0 %v739
          %966 = vmatpush1.msra.mxu0 %v738
          %967 = vmatprep.mubr.f32.mxu0 %v519
          %968 = vmatmul.mubr.f32.gmra.mrb[0].mxu0 %v518
          %v969 = vpop.f32.mrb[0].mxu0
          %v970 = vadd.f32 0.0, %v969
          %v971 = vpop.f32.mrb[0].mxu0
          %v972 = vadd.f32 0.0, %v971
          %973 = vmatprep.mubr.f32.mxu0 %v521
          %974 = vmatmul.mubr.f32.gmra.mrb[0].mxu0 %v520
          %v975 = vpop.f32.mrb[0].mxu0
          %v976 = vadd.f32 0.0, %v975
          %v977 = vpop.f32.mrb[0].mxu0
          %v978 = vadd.f32 0.0, %v977
          %979 = vmatprep.mubr.f32.mxu0 %v523
          %980 = vmatmul.mubr.f32.gmra.mrb[0].mxu0 %v522
          %v981 = vpop.f32.mrb[0].mxu0
          %v982 = vadd.f32 0.0, %v981
          %v983 = vpop.f32.mrb[0].mxu0
          %v984 = vadd.f32 0.0, %v983
          %985 = vmatprep.mubr.f32.mxu0 %v525
          %986 = vmatmul.mubr.f32.gmra.mrb[0].mxu0 %v524
          %v987 = vpop.f32.mrb[0].mxu0
          %v988 = vadd.f32 0.0, %v987
          %v989 = vpop.f32.mrb[0].mxu0
          %v990 = vadd.f32 0.0, %v989
          %991 = vmatprep.mubr.f32.mxu0 %v527
          %992 = vmatmul.mubr.f32.gmra.mrb[0].mxu0 %v526
          %v993 = vpop.f32.mrb[0].mxu0
          %v994 = vadd.f32 0.0, %v993
          %v995 = vpop.f32.mrb[0].mxu0
          %v996 = vadd.f32 0.0, %v995
          %997 = vmatprep.mubr.f32.mxu0 %v529
          %998 = vmatmul.mubr.f32.gmra.mrb[0].mxu0 %v528
          %v999 = vpop.f32.mrb[0].mxu0
          %v1000 = vadd.f32 0.0, %v999
          %v1001 = vpop.f32.mrb[0].mxu0
          %v1002 = vadd.f32 0.0, %v1001
          %1003 = vmatprep.mubr.f32.mxu0 %v531
          %1004 = vmatmul.mubr.f32.gmra.mrb[0].mxu0 %v530
          %v1005 = vpop.f32.mrb[0].mxu0
          %v1006 = vadd.f32 0.0, %v1005
          %v1007 = vpop.f32.mrb[0].mxu0
          %v1008 = vadd.f32 0.0, %v1007
          %1009 = vmatprep.mubr.f32.mxu0 %v533
          %1010 = vmatmul.mubr.f32.gmra.mrb[0].mxu0 %v532
          %v1011 = vpop.f32.mrb[0].mxu0
          %v1012 = vadd.f32 0.0, %v1011
          %v1013 = vpop.f32.mrb[0].mxu0
          %v1014 = vadd.f32 0.0, %v1013
          %1015 = vmatprep.mubr.f32.mxu0 %v535
          %1016 = vmatmul.mubr.f32.gmra.mrb[0].mxu0 %v534
          %v1017 = vpop.f32.mrb[0].mxu0
          %v1018 = vadd.f32 0.0, %v1017
          %v1019 = vpop.f32.mrb[0].mxu0
          %v1020 = vadd.f32 0.0, %v1019
          %1021 = vmatprep.mubr.f32.mxu0 %v537
          %1022 = vmatmul.mubr.f32.gmra.mrb[0].mxu0 %v536
          %v1023 = vpop.f32.mrb[0].mxu0
          %v1024 = vadd.f32 0.0, %v1023
          %v1025 = vpop.f32.mrb[0].mxu0
          %v1026 = vadd.f32 0.0, %v1025
          %1027 = vmatprep.mubr.f32.mxu0 %v539
          %1028 = vmatmul.mubr.f32.gmra.mrb[0].mxu0 %v538
          %v1029 = vpop.f32.mrb[0].mxu0
          %v1030 = vadd.f32 0.0, %v1029
          %v1031 = vpop.f32.mrb[0].mxu0
          %v1032 = vadd.f32 0.0, %v1031
          %1033 = vmatprep.mubr.f32.mxu0 %v541
          %1034 = vmatmul.mubr.f32.gmra.mrb[0].mxu0 %v540
          %v1035 = vpop.f32.mrb[0].mxu0
          %v1036 = vadd.f32 0.0, %v1035
          %v1037 = vpop.f32.mrb[0].mxu0
          %v1038 = vadd.f32 0.0, %v1037
          %1039 = vmatprep.mubr.f32.mxu0 %v543
          %1040 = vmatmul.mubr.f32.gmra.mrb[0].mxu0 %v542
          %v1041 = vpop.f32.mrb[0].mxu0
          %v1042 = vadd.f32 0.0, %v1041
          %v1043 = vpop.f32.mrb[0].mxu0
          %v1044 = vadd.f32 0.0, %v1043
          %1045 = vmatprep.mubr.f32.mxu0 %v545
          %1046 = vmatmul.mubr.f32.gmra.mrb[0].mxu0 %v544
          %v1047 = vpop.f32.mrb[0].mxu0
          %v1048 = vadd.f32 0.0, %v1047
          %v1049 = vpop.f32.mrb[0].mxu0
          %v1050 = vadd.f32 0.0, %v1049
          %1051 = vmatprep.mubr.f32.mxu0 %v547
          %1052 = vmatmul.mubr.f32.gmra.mrb[0].mxu0 %v546
          %v1053 = vpop.f32.mrb[0].mxu0
          %v1054 = vadd.f32 0.0, %v1053
          %v1055 = vpop.f32.mrb[0].mxu0
          %v1056 = vadd.f32 0.0, %v1055
          %1057 = vmatprep.mubr.f32.mxu0 %v549
          %1058 = vmatmul.mubr.f32.gmra.mrb[0].mxu0 %v548
          %v1059 = vpop.f32.mrb[0].mxu0
          %v1060 = vadd.f32 0.0, %v1059
          %v1061 = vpop.f32.mrb[0].mxu0
          %v1062 = vadd.f32 0.0, %v1061
          %1063 = vdwg.mxu0
          %1064 = vmatprep.subr.mxu0 %v555
          %1065 = vmatpush1.msra.mxu0 %v554
          %1066 = vmatprep.subr.mxu0 %v561
          %1067 = vmatpush1.msra.mxu0 %v560
          %1068 = vmatprep.subr.mxu0 %v567
          %1069 = vmatpush1.msra.mxu0 %v566
          %1070 = vmatprep.subr.mxu0 %v573
          %1071 = vmatpush1.msra.mxu0 %v572
          %1072 = vmatprep.subr.mxu0 %v579
          %1073 = vmatpush1.msra.mxu0 %v578
          %1074 = vmatprep.subr.mxu0 %v585
          %1075 = vmatpush1.msra.mxu0 %v584
          %1076 = vmatprep.subr.mxu0 %v591
          %1077 = vmatpush1.msra.mxu0 %v590
          %1078 = vmatprep.subr.mxu0 %v597
          %1079 = vmatpush1.msra.mxu0 %v596
          %1080 = vmatprep.subr.mxu0 %v603
          %1081 = vmatpush1.msra.mxu0 %v602
          %1082 = vmatprep.subr.mxu0 %v609
          %1083 = vmatpush1.msra.mxu0 %v608
          %1084 = vmatprep.subr.mxu0 %v615
          %1085 = vmatpush1.msra.mxu0 %v614
          %1086 = vmatprep.subr.mxu0 %v621
          %1087 = vmatpush1.msra.mxu0 %v620
          %1088 = vmatprep.subr.mxu0 %v627
          %1089 = vmatpush1.msra.mxu0 %v626
          %1090 = vmatprep.subr.mxu0 %v633
          %1091 = vmatpush1.msra.mxu0 %v632
          %1092 = vmatprep.subr.mxu0 %v639
          %1093 = vmatpush1.msra.mxu0 %v638
          %1094 = vmatprep.subr.mxu0 %v645
          %1095 = vmatpush1.msra.mxu0 %v644
          %1096 = vmatprep.subr.mxu0 %v651
          %1097 = vmatpush1.msra.mxu0 %v650
          %1098 = vmatprep.subr.mxu0 %v657
          %1099 = vmatpush1.msra.mxu0 %v656
          %1100 = vmatprep.subr.mxu0 %v663
          %1101 = vmatpush1.msra.mxu0 %v662
          %1102 = vmatprep.subr.mxu0 %v669
          %1103 = vmatpush1.msra.mxu0 %v668
          %1104 = vmatprep.subr.mxu0 %v675
          %1105 = vmatpush1.msra.mxu0 %v674
          %1106 = vmatprep.subr.mxu0 %v681
          %1107 = vmatpush1.msra.mxu0 %v680
          %1108 = vmatprep.subr.mxu0 %v687
          %1109 = vmatpush1.msra.mxu0 %v686
          %1110 = vmatprep.subr.mxu0 %v693
          %1111 = vmatpush1.msra.mxu0 %v692
          %1112 = vmatprep.subr.mxu0 %v699
          %1113 = vmatpush1.msra.mxu0 %v698
          %1114 = vmatprep.subr.mxu0 %v705
          %1115 = vmatpush1.msra.mxu0 %v704
          %1116 = vmatprep.subr.mxu0 %v711
          %1117 = vmatpush1.msra.mxu0 %v710
          %1118 = vmatprep.subr.mxu0 %v717
          %1119 = vmatpush1.msra.mxu0 %v716
          %1120 = vmatprep.subr.mxu0 %v723
          %1121 = vmatpush1.msra.mxu0 %v722
          %1122 = vmatprep.subr.mxu0 %v729
          %1123 = vmatpush1.msra.mxu0 %v728
          %1124 = vmatprep.subr.mxu0 %v735
          %1125 = vmatpush1.msra.mxu0 %v734
          %1126 = vmatprep.subr.mxu0 %v741
          %1127 = vmatpush1.msra.mxu0 %v740
          %1128 = vmatprep.mubr.f32.mxu0 %v519
          %1129 = vmatmul.mubr.f32.gmra.mrb[0].mxu0 %v518
          %v1130 = vpop.f32.mrb[0].mxu0
          %v1131 = vadd.f32 0.0, %v1130
          %v1132 = vpop.f32.mrb[0].mxu0
          %v1133 = vadd.f32 0.0, %v1132
          %1134 = vmatprep.mubr.f32.mxu0 %v521
          %1135 = vmatmul.mubr.f32.gmra.mrb[0].mxu0 %v520
          %v1136 = vpop.f32.mrb[0].mxu0
          %v1137 = vadd.f32 0.0, %v1136
          %v1138 = vpop.f32.mrb[0].mxu0
          %v1139 = vadd.f32 0.0, %v1138
          %1140 = vmatprep.mubr.f32.mxu0 %v523
          %1141 = vmatmul.mubr.f32.gmra.mrb[0].mxu0 %v522
          %v1142 = vpop.f32.mrb[0].mxu0
          %v1143 = vadd.f32 0.0, %v1142
          %v1144 = vpop.f32.mrb[0].mxu0
          %v1145 = vadd.f32 0.0, %v1144
          %1146 = vmatprep.mubr.f32.mxu0 %v525
          %1147 = vmatmul.mubr.f32.gmra.mrb[0].mxu0 %v524
          %v1148 = vpop.f32.mrb[0].mxu0
          %v1149 = vadd.f32 0.0, %v1148
          %v1150 = vpop.f32.mrb[0].mxu0
          %v1151 = vadd.f32 0.0, %v1150
          %1152 = vmatprep.mubr.f32.mxu0 %v527
          %1153 = vmatmul.mubr.f32.gmra.mrb[0].mxu0 %v526
          %v1154 = vpop.f32.mrb[0].mxu0
          %v1155 = vadd.f32 0.0, %v1154
          %v1156 = vpop.f32.mrb[0].mxu0
          %v1157 = vadd.f32 0.0, %v1156
          %1158 = vmatprep.mubr.f32.mxu0 %v529
          %1159 = vmatmul.mubr.f32.gmra.mrb[0].mxu0 %v528
          %v1160 = vpop.f32.mrb[0].mxu0
          %v1161 = vadd.f32 0.0, %v1160
          %v1162 = vpop.f32.mrb[0].mxu0
          %v1163 = vadd.f32 0.0, %v1162
          %1164 = vmatprep.mubr.f32.mxu0 %v531
          %1165 = vmatmul.mubr.f32.gmra.mrb[0].mxu0 %v530
          %v1166 = vpop.f32.mrb[0].mxu0
          %v1167 = vadd.f32 0.0, %v1166
          %v1168 = vpop.f32.mrb[0].mxu0
          %v1169 = vadd.f32 0.0, %v1168
          %1170 = vmatprep.mubr.f32.mxu0 %v533
          %1171 = vmatmul.mubr.f32.gmra.mrb[0].mxu0 %v532
          %v1172 = vpop.f32.mrb[0].mxu0
          %v1173 = vadd.f32 0.0, %v1172
          %v1174 = vpop.f32.mrb[0].mxu0
          %v1175 = vadd.f32 0.0, %v1174
          %1176 = vmatprep.mubr.f32.mxu0 %v535
          %1177 = vmatmul.mubr.f32.gmra.mrb[0].mxu0 %v534
          %v1178 = vpop.f32.mrb[0].mxu0
          %v1179 = vadd.f32 0.0, %v1178
          %v1180 = vpop.f32.mrb[0].mxu0
          %v1181 = vadd.f32 0.0, %v1180
          %1182 = vmatprep.mubr.f32.mxu0 %v537
          %1183 = vmatmul.mubr.f32.gmra.mrb[0].mxu0 %v536
          %v1184 = vpop.f32.mrb[0].mxu0
          %v1185 = vadd.f32 0.0, %v1184
          %v1186 = vpop.f32.mrb[0].mxu0
          %v1187 = vadd.f32 0.0, %v1186
          %1188 = vmatprep.mubr.f32.mxu0 %v539
          %1189 = vmatmul.mubr.f32.gmra.mrb[0].mxu0 %v538
          %v1190 = vpop.f32.mrb[0].mxu0
          %v1191 = vadd.f32 0.0, %v1190
          %v1192 = vpop.f32.mrb[0].mxu0
          %v1193 = vadd.f32 0.0, %v1192
          %1194 = vmatprep.mubr.f32.mxu0 %v541
          %1195 = vmatmul.mubr.f32.gmra.mrb[0].mxu0 %v540
          %v1196 = vpop.f32.mrb[0].mxu0
          %v1197 = vadd.f32 0.0, %v1196
          %v1198 = vpop.f32.mrb[0].mxu0
          %v1199 = vadd.f32 0.0, %v1198
          %1200 = vmatprep.mubr.f32.mxu0 %v543
          %1201 = vmatmul.mubr.f32.gmra.mrb[0].mxu0 %v542
          %v1202 = vpop.f32.mrb[0].mxu0
          %v1203 = vadd.f32 0.0, %v1202
          %v1204 = vpop.f32.mrb[0].mxu0
          %v1205 = vadd.f32 0.0, %v1204
          %1206 = vmatprep.mubr.f32.mxu0 %v545
          %1207 = vmatmul.mubr.f32.gmra.mrb[0].mxu0 %v544
          %v1208 = vpop.f32.mrb[0].mxu0
          %v1209 = vadd.f32 0.0, %v1208
          %v1210 = vpop.f32.mrb[0].mxu0
          %v1211 = vadd.f32 0.0, %v1210
          %1212 = vmatprep.mubr.f32.mxu0 %v547
          %1213 = vmatmul.mubr.f32.gmra.mrb[0].mxu0 %v546
          %v1214 = vpop.f32.mrb[0].mxu0
          %v1215 = vadd.f32 0.0, %v1214
          %v1216 = vpop.f32.mrb[0].mxu0
          %v1217 = vadd.f32 0.0, %v1216
          %1218 = vmatprep.mubr.f32.mxu0 %v549
          %1219 = vmatmul.mubr.f32.gmra.mrb[0].mxu0 %v548
          %v1220 = vpop.f32.mrb[0].mxu0
          %v1221 = vadd.f32 0.0, %v1220
          %v1222 = vpop.f32.mrb[0].mxu0
          %v1223 = vadd.f32 0.0, %v1222
          %1224 = vdwg.mxu0
          %v1225 = vxor.u32 %v809, 2147483648
          %v1226 = vxor.u32 %v811, 2147483648
          %v1227 = vxor.u32 %v970, 2147483648
          %v1228 = vxor.u32 %v815, 2147483648
          %v1229 = vxor.u32 %v817, 2147483648
          %v1230 = vxor.u32 %v976, 2147483648
          %v1231 = vxor.u32 %v821, 2147483648
          %v1232 = vxor.u32 %v823, 2147483648
          %v1233 = vxor.u32 %v982, 2147483648
          %v1234 = vxor.u32 %v827, 2147483648
          %v1235 = vxor.u32 %v829, 2147483648
          %v1236 = vxor.u32 %v988, 2147483648
          %v1237 = vxor.u32 %v833, 2147483648
          %v1238 = vxor.u32 %v835, 2147483648
          %v1239 = vxor.u32 %v994, 2147483648
          %v1240 = vxor.u32 %v839, 2147483648
          %v1241 = vxor.u32 %v841, 2147483648
          %v1242 = vxor.u32 %v1000, 2147483648
          %v1243 = vxor.u32 %v845, 2147483648
          %v1244 = vxor.u32 %v847, 2147483648
          %v1245 = vxor.u32 %v1006, 2147483648
          %v1246 = vxor.u32 %v851, 2147483648
          %v1247 = vxor.u32 %v853, 2147483648
          %v1248 = vxor.u32 %v1012, 2147483648
          %v1249 = vxor.u32 %v857, 2147483648
          %v1250 = vxor.u32 %v859, 2147483648
          %v1251 = vxor.u32 %v1018, 2147483648
          %v1252 = vxor.u32 %v863, 2147483648
          %v1253 = vxor.u32 %v865, 2147483648
          %v1254 = vxor.u32 %v1024, 2147483648
          %v1255 = vxor.u32 %v869, 2147483648
          %v1256 = vxor.u32 %v871, 2147483648
          %v1257 = vxor.u32 %v1030, 2147483648
          %v1258 = vxor.u32 %v875, 2147483648
          %v1259 = vxor.u32 %v877, 2147483648
          %v1260 = vxor.u32 %v1036, 2147483648
          %v1261 = vxor.u32 %v881, 2147483648
          %v1262 = vxor.u32 %v883, 2147483648
          %v1263 = vxor.u32 %v1042, 2147483648
          %v1264 = vxor.u32 %v887, 2147483648
          %v1265 = vxor.u32 %v889, 2147483648
          %v1266 = vxor.u32 %v1048, 2147483648
          %v1267 = vxor.u32 %v893, 2147483648
          %v1268 = vxor.u32 %v895, 2147483648
          %v1269 = vxor.u32 %v1054, 2147483648
          %v1270 = vxor.u32 %v899, 2147483648
          %v1271 = vxor.u32 %v901, 2147483648
          %v1272 = vxor.u32 %v1060, 2147483648
          %v1273 = vmul.f32 %v1225, 1.442695
          %v1274 = vpow.pop %v1273
          %v1275 = vmul.f32 %v1226, 1.442695
          %v1276 = vpow.pop %v1275
          %v1277 = vmul.f32 %v1227, 1.442695
          %v1278 = vpow.pop %v1277
          %v1279 = vmul.f32 %v1228, 1.442695
          %v1280 = vpow.pop %v1279
          %v1281 = vmul.f32 %v1229, 1.442695
          %v1282 = vpow.pop %v1281
          %v1283 = vmul.f32 %v1230, 1.442695
          %v1284 = vpow.pop %v1283
          %v1285 = vmul.f32 %v1231, 1.442695
          %v1286 = vpow.pop %v1285
          %v1287 = vmul.f32 %v1232, 1.442695
          %v1288 = vpow.pop %v1287
          %v1289 = vmul.f32 %v1233, 1.442695
          %v1290 = vpow.pop %v1289
          %v1291 = vmul.f32 %v1234, 1.442695
          %v1292 = vpow.pop %v1291
          %v1293 = vmul.f32 %v1235, 1.442695
          %v1294 = vpow.pop %v1293
          %v1295 = vmul.f32 %v1236, 1.442695
          %v1296 = vpow.pop %v1295
          %v1297 = vmul.f32 %v1237, 1.442695
          %v1298 = vpow.pop %v1297
          %v1299 = vmul.f32 %v1238, 1.442695
          %v1300 = vpow.pop %v1299
          %v1301 = vmul.f32 %v1239, 1.442695
          %v1302 = vpow.pop %v1301
          %v1303 = vmul.f32 %v1240, 1.442695
          %v1304 = vpow.pop %v1303
          %v1305 = vmul.f32 %v1241, 1.442695
          %v1306 = vpow.pop %v1305
          %v1307 = vmul.f32 %v1242, 1.442695
          %v1308 = vpow.pop %v1307
          %v1309 = vmul.f32 %v1243, 1.442695
          %v1310 = vpow.pop %v1309
          %v1311 = vmul.f32 %v1244, 1.442695
          %v1312 = vpow.pop %v1311
          %v1313 = vmul.f32 %v1245, 1.442695
          %v1314 = vpow.pop %v1313
          %v1315 = vmul.f32 %v1246, 1.442695
          %v1316 = vpow.pop %v1315
          %v1317 = vmul.f32 %v1247, 1.442695
          %v1318 = vpow.pop %v1317
          %v1319 = vmul.f32 %v1248, 1.442695
          %v1320 = vpow.pop %v1319
          %v1321 = vmul.f32 %v1249, 1.442695
          %v1322 = vpow.pop %v1321
          %v1323 = vmul.f32 %v1250, 1.442695
          %v1324 = vpow.pop %v1323
          %v1325 = vmul.f32 %v1251, 1.442695
          %v1326 = vpow.pop %v1325
          %v1327 = vmul.f32 %v1252, 1.442695
          %v1328 = vpow.pop %v1327
          %v1329 = vmul.f32 %v1253, 1.442695
          %v1330 = vpow.pop %v1329
          %v1331 = vmul.f32 %v1254, 1.442695
          %v1332 = vpow.pop %v1331
          %v1333 = vmul.f32 %v1255, 1.442695
          %v1334 = vpow.pop %v1333
          %v1335 = vmul.f32 %v1256, 1.442695
          %v1336 = vpow.pop %v1335
          %v1337 = vmul.f32 %v1257, 1.442695
          %v1338 = vpow.pop %v1337
          %v1339 = vmul.f32 %v1258, 1.442695
          %v1340 = vpow.pop %v1339
          %v1341 = vmul.f32 %v1259, 1.442695
          %v1342 = vpow.pop %v1341
          %v1343 = vmul.f32 %v1260, 1.442695
          %v1344 = vpow.pop %v1343
          %v1345 = vmul.f32 %v1261, 1.442695
          %v1346 = vpow.pop %v1345
          %v1347 = vmul.f32 %v1262, 1.442695
          %v1348 = vpow.pop %v1347
          %v1349 = vmul.f32 %v1263, 1.442695
          %v1350 = vpow.pop %v1349
          %v1351 = vmul.f32 %v1264, 1.442695
          %v1352 = vpow.pop %v1351
          %v1353 = vmul.f32 %v1265, 1.442695
          %v1354 = vpow.pop %v1353
          %v1355 = vmul.f32 %v1266, 1.442695
          %v1356 = vpow.pop %v1355
          %v1357 = vmul.f32 %v1267, 1.442695
          %v1358 = vpow.pop %v1357
          %v1359 = vmul.f32 %v1268, 1.442695
          %v1360 = vpow.pop %v1359
          %v1361 = vmul.f32 %v1269, 1.442695
          %v1362 = vpow.pop %v1361
          %v1363 = vmul.f32 %v1270, 1.442695
          %v1364 = vpow.pop %v1363
          %v1365 = vmul.f32 %v1271, 1.442695
          %v1366 = vpow.pop %v1365
          %v1367 = vmul.f32 %v1272, 1.442695
          %v1368 = vpow.pop %v1367
          %v1369 = vadd.f32 %v1274, 1.0
          %v1370 = vadd.f32 %v1276, 1.0
          %v1371 = vadd.f32 %v1278, 1.0
          %v1372 = vadd.f32 %v1280, 1.0
          %v1373 = vadd.f32 %v1282, 1.0
          %v1374 = vadd.f32 %v1284, 1.0
          %v1375 = vadd.f32 %v1286, 1.0
          %v1376 = vadd.f32 %v1288, 1.0
          %v1377 = vadd.f32 %v1290, 1.0
          %v1378 = vadd.f32 %v1292, 1.0
          %v1379 = vadd.f32 %v1294, 1.0
          %v1380 = vadd.f32 %v1296, 1.0
          %v1381 = vadd.f32 %v1298, 1.0
          %v1382 = vadd.f32 %v1300, 1.0
          %v1383 = vadd.f32 %v1302, 1.0
          %v1384 = vadd.f32 %v1304, 1.0
          %v1385 = vadd.f32 %v1306, 1.0
          %v1386 = vadd.f32 %v1308, 1.0
          %v1387 = vadd.f32 %v1310, 1.0
          %v1388 = vadd.f32 %v1312, 1.0
          %v1389 = vadd.f32 %v1314, 1.0
          %v1390 = vadd.f32 %v1316, 1.0
          %v1391 = vadd.f32 %v1318, 1.0
          %v1392 = vadd.f32 %v1320, 1.0
          %v1393 = vadd.f32 %v1322, 1.0
          %v1394 = vadd.f32 %v1324, 1.0
          %v1395 = vadd.f32 %v1326, 1.0
          %v1396 = vadd.f32 %v1328, 1.0
          %v1397 = vadd.f32 %v1330, 1.0
          %v1398 = vadd.f32 %v1332, 1.0
          %v1399 = vadd.f32 %v1334, 1.0
          %v1400 = vadd.f32 %v1336, 1.0
          %v1401 = vadd.f32 %v1338, 1.0
          %v1402 = vadd.f32 %v1340, 1.0
          %v1403 = vadd.f32 %v1342, 1.0
          %v1404 = vadd.f32 %v1344, 1.0
          %v1405 = vadd.f32 %v1346, 1.0
          %v1406 = vadd.f32 %v1348, 1.0
          %v1407 = vadd.f32 %v1350, 1.0
          %v1408 = vadd.f32 %v1352, 1.0
          %v1409 = vadd.f32 %v1354, 1.0
          %v1410 = vadd.f32 %v1356, 1.0
          %v1411 = vadd.f32 %v1358, 1.0
          %v1412 = vadd.f32 %v1360, 1.0
          %v1413 = vadd.f32 %v1362, 1.0
          %v1414 = vadd.f32 %v1364, 1.0
          %v1415 = vadd.f32 %v1366, 1.0
          %v1416 = vadd.f32 %v1368, 1.0
          %v1417 = vrcp.pop %v1369
          %v1418 = vmul.f32 1.0, %v1417
          %v1419 = vrcp.pop %v1370
          %v1420 = vmul.f32 1.0, %v1419
          %v1421 = vrcp.pop %v1371
          %v1422 = vmul.f32 1.0, %v1421
          %v1423 = vrcp.pop %v1372
          %v1424 = vmul.f32 1.0, %v1423
          %v1425 = vrcp.pop %v1373
          %v1426 = vmul.f32 1.0, %v1425
          %v1427 = vrcp.pop %v1374
          %v1428 = vmul.f32 1.0, %v1427
          %v1429 = vrcp.pop %v1375
          %v1430 = vmul.f32 1.0, %v1429
          %v1431 = vrcp.pop %v1376
          %v1432 = vmul.f32 1.0, %v1431
          %v1433 = vrcp.pop %v1377
          %v1434 = vmul.f32 1.0, %v1433
          %v1435 = vrcp.pop %v1378
          %v1436 = vmul.f32 1.0, %v1435
          %v1437 = vrcp.pop %v1379
          %v1438 = vmul.f32 1.0, %v1437
          %v1439 = vrcp.pop %v1380
          %v1440 = vmul.f32 1.0, %v1439
          %v1441 = vrcp.pop %v1381
          %v1442 = vmul.f32 1.0, %v1441
          %v1443 = vrcp.pop %v1382
          %v1444 = vmul.f32 1.0, %v1443
          %v1445 = vrcp.pop %v1383
          %v1446 = vmul.f32 1.0, %v1445
          %v1447 = vrcp.pop %v1384
          %v1448 = vmul.f32 1.0, %v1447
          %v1449 = vrcp.pop %v1385
          %v1450 = vmul.f32 1.0, %v1449
          %v1451 = vrcp.pop %v1386
          %v1452 = vmul.f32 1.0, %v1451
          %v1453 = vrcp.pop %v1387
          %v1454 = vmul.f32 1.0, %v1453
          %v1455 = vrcp.pop %v1388
          %v1456 = vmul.f32 1.0, %v1455
          %v1457 = vrcp.pop %v1389
          %v1458 = vmul.f32 1.0, %v1457
          %v1459 = vrcp.pop %v1390
          %v1460 = vmul.f32 1.0, %v1459
          %v1461 = vrcp.pop %v1391
          %v1462 = vmul.f32 1.0, %v1461
          %v1463 = vrcp.pop %v1392
          %v1464 = vmul.f32 1.0, %v1463
          %v1465 = vrcp.pop %v1393
          %v1466 = vmul.f32 1.0, %v1465
          %v1467 = vrcp.pop %v1394
          %v1468 = vmul.f32 1.0, %v1467
          %v1469 = vrcp.pop %v1395
          %v1470 = vmul.f32 1.0, %v1469
          %v1471 = vrcp.pop %v1396
          %v1472 = vmul.f32 1.0, %v1471
          %v1473 = vrcp.pop %v1397
          %v1474 = vmul.f32 1.0, %v1473
          %v1475 = vrcp.pop %v1398
          %v1476 = vmul.f32 1.0, %v1475
          %v1477 = vrcp.pop %v1399
          %v1478 = vmul.f32 1.0, %v1477
          %v1479 = vrcp.pop %v1400
          %v1480 = vmul.f32 1.0, %v1479
          %v1481 = vrcp.pop %v1401
          %v1482 = vmul.f32 1.0, %v1481
          %v1483 = vrcp.pop %v1402
          %v1484 = vmul.f32 1.0, %v1483
          %v1485 = vrcp.pop %v1403
          %v1486 = vmul.f32 1.0, %v1485
          %v1487 = vrcp.pop %v1404
          %v1488 = vmul.f32 1.0, %v1487
          %v1489 = vrcp.pop %v1405
          %v1490 = vmul.f32 1.0, %v1489
          %v1491 = vrcp.pop %v1406
          %v1492 = vmul.f32 1.0, %v1491
          %v1493 = vrcp.pop %v1407
          %v1494 = vmul.f32 1.0, %v1493
          %v1495 = vrcp.pop %v1408
          %v1496 = vmul.f32 1.0, %v1495
          %v1497 = vrcp.pop %v1409
          %v1498 = vmul.f32 1.0, %v1497
          %v1499 = vrcp.pop %v1410
          %v1500 = vmul.f32 1.0, %v1499
          %v1501 = vrcp.pop %v1411
          %v1502 = vmul.f32 1.0, %v1501
          %v1503 = vrcp.pop %v1412
          %v1504 = vmul.f32 1.0, %v1503
          %v1505 = vrcp.pop %v1413
          %v1506 = vmul.f32 1.0, %v1505
          %v1507 = vrcp.pop %v1414
          %v1508 = vmul.f32 1.0, %v1507
          %v1509 = vrcp.pop %v1415
          %v1510 = vmul.f32 1.0, %v1509
          %v1511 = vrcp.pop %v1416
          %v1512 = vmul.f32 1.0, %v1511
          %v1513 = vmul.f32 %v809, %v1418
          %v1514 = vmul.f32 %v811, %v1420
          %v1515 = vmul.f32 %v970, %v1422
          %v1516 = vmul.f32 %v815, %v1424
          %v1517 = vmul.f32 %v817, %v1426
          %v1518 = vmul.f32 %v976, %v1428
          %v1519 = vmul.f32 %v821, %v1430
          %v1520 = vmul.f32 %v823, %v1432
          %v1521 = vmul.f32 %v982, %v1434
          %v1522 = vmul.f32 %v827, %v1436
          %v1523 = vmul.f32 %v829, %v1438
          %v1524 = vmul.f32 %v988, %v1440
          %v1525 = vmul.f32 %v833, %v1442
          %v1526 = vmul.f32 %v835, %v1444
          %v1527 = vmul.f32 %v994, %v1446
          %v1528 = vmul.f32 %v839, %v1448
          %v1529 = vmul.f32 %v841, %v1450
          %v1530 = vmul.f32 %v1000, %v1452
          %v1531 = vmul.f32 %v845, %v1454
          %v1532 = vmul.f32 %v847, %v1456
          %v1533 = vmul.f32 %v1006, %v1458
          %v1534 = vmul.f32 %v851, %v1460
          %v1535 = vmul.f32 %v853, %v1462
          %v1536 = vmul.f32 %v1012, %v1464
          %v1537 = vmul.f32 %v857, %v1466
          %v1538 = vmul.f32 %v859, %v1468
          %v1539 = vmul.f32 %v1018, %v1470
          %v1540 = vmul.f32 %v863, %v1472
          %v1541 = vmul.f32 %v865, %v1474
          %v1542 = vmul.f32 %v1024, %v1476
          %v1543 = vmul.f32 %v869, %v1478
          %v1544 = vmul.f32 %v871, %v1480
          %v1545 = vmul.f32 %v1030, %v1482
          %v1546 = vmul.f32 %v875, %v1484
          %v1547 = vmul.f32 %v877, %v1486
          %v1548 = vmul.f32 %v1036, %v1488
          %v1549 = vmul.f32 %v881, %v1490
          %v1550 = vmul.f32 %v883, %v1492
          %v1551 = vmul.f32 %v1042, %v1494
          %v1552 = vmul.f32 %v887, %v1496
          %v1553 = vmul.f32 %v889, %v1498
          %v1554 = vmul.f32 %v1048, %v1500
          %v1555 = vmul.f32 %v893, %v1502
          %v1556 = vmul.f32 %v895, %v1504
          %v1557 = vmul.f32 %v1054, %v1506
          %v1558 = vmul.f32 %v899, %v1508
          %v1559 = vmul.f32 %v901, %v1510
          %v1560 = vmul.f32 %v1060, %v1512
          %v1561 = vmul.f32 %v1513, %v972
          %v1562 = vmul.f32 %v1514, %v1131
          %v1563 = vmul.f32 %v1515, %v1133
          %v1564 = vmul.f32 %v1516, %v978
          %v1565 = vmul.f32 %v1517, %v1137
          %v1566 = vmul.f32 %v1518, %v1139
          %v1567 = vmul.f32 %v1519, %v984
          %v1568 = vmul.f32 %v1520, %v1143
          %v1569 = vmul.f32 %v1521, %v1145
          %v1570 = vmul.f32 %v1522, %v990
          %v1571 = vmul.f32 %v1523, %v1149
          %v1572 = vmul.f32 %v1524, %v1151
          %v1573 = vmul.f32 %v1525, %v996
          %v1574 = vmul.f32 %v1526, %v1155
          %v1575 = vmul.f32 %v1527, %v1157
          %v1576 = vmul.f32 %v1528, %v1002
          %v1577 = vmul.f32 %v1529, %v1161
          %v1578 = vmul.f32 %v1530, %v1163
          %v1579 = vmul.f32 %v1531, %v1008
          %v1580 = vmul.f32 %v1532, %v1167
          %v1581 = vmul.f32 %v1533, %v1169
          %v1582 = vmul.f32 %v1534, %v1014
          %v1583 = vmul.f32 %v1535, %v1173
          %v1584 = vmul.f32 %v1536, %v1175
          %v1585 = vmul.f32 %v1537, %v1020
          %v1586 = vmul.f32 %v1538, %v1179
          %v1587 = vmul.f32 %v1539, %v1181
          %v1588 = vmul.f32 %v1540, %v1026
          %v1589 = vmul.f32 %v1541, %v1185
          %v1590 = vmul.f32 %v1542, %v1187
          %v1591 = vmul.f32 %v1543, %v1032
          %v1592 = vmul.f32 %v1544, %v1191
          %v1593 = vmul.f32 %v1545, %v1193
          %v1594 = vmul.f32 %v1546, %v1038
          %v1595 = vmul.f32 %v1547, %v1197
          %v1596 = vmul.f32 %v1548, %v1199
          %v1597 = vmul.f32 %v1549, %v1044
          %v1598 = vmul.f32 %v1550, %v1203
          %v1599 = vmul.f32 %v1551, %v1205
          %v1600 = vmul.f32 %v1552, %v1050
          %v1601 = vmul.f32 %v1553, %v1209
          %v1602 = vmul.f32 %v1554, %v1211
          %v1603 = vmul.f32 %v1555, %v1056
          %v1604 = vmul.f32 %v1556, %v1215
          %v1605 = vmul.f32 %v1557, %v1217
          %v1606 = vmul.f32 %v1558, %v1062
          %v1607 = vmul.f32 %v1559, %v1221
          %v1608 = vmul.f32 %v1560, %v1223
          %v1609 = vld [vmem:[%s394] sm:$0xff]
          %v1610 = vld [vmem:[%s394 + $0x8] sm:$0xff]
          %v1611 = vld [vmem:[%s394 + $0x10] sm:$0xff]
          %v1612 = vld [vmem:[%s394 + $0x18] sm:$0xff]
          %v1613 = vld [vmem:[%s394 + $0x20] sm:$0xff]
          %v1614 = vld [vmem:[%s394 + $0x28] sm:$0xff]
          %v1615 = vld [vmem:[%s394 + $0x30] sm:$0xff]
          %v1616 = vld [vmem:[%s394 + $0x38] sm:$0xff]
          %v1617 = vld [vmem:[%s394 + $0x40] sm:$0xff]
          %v1618 = vld [vmem:[%s394 + $0x48] sm:$0xff]
          %v1619 = vld [vmem:[%s394 + $0x50] sm:$0xff]
          %v1620 = vld [vmem:[%s394 + $0x58] sm:$0xff]
          %v1621 = vld [vmem:[%s394 + $0x60] sm:$0xff]
          %v1622 = vld [vmem:[%s394 + $0x68] sm:$0xff]
          %v1623 = vld [vmem:[%s394 + $0x70] sm:$0xff]
          %v1624 = vld [vmem:[%s394 + $0x78] sm:$0xff]
          %v1625 = vld [vmem:[%s394 + $0x80] sm:$0xff]
          %v1626 = vld [vmem:[%s394 + $0x88] sm:$0xff]
          %v1627 = vld [vmem:[%s394 + $0x90] sm:$0xff]
          %v1628 = vld [vmem:[%s394 + $0x98] sm:$0xff]
          %v1629 = vld [vmem:[%s394 + $0xa0] sm:$0xff]
          %v1630 = vld [vmem:[%s394 + $0xa8] sm:$0xff]
          %v1631 = vld [vmem:[%s394 + $0xb0] sm:$0xff]
          %v1632 = vld [vmem:[%s394 + $0xb8] sm:$0xff]
          %v1633 = vld [vmem:[%s394 + $0xc0] sm:$0xff]
          %v1634 = vld [vmem:[%s394 + $0xc8] sm:$0xff]
          %v1635 = vld [vmem:[%s394 + $0xd0] sm:$0xff]
          %v1636 = vld [vmem:[%s394 + $0xd8] sm:$0xff]
          %v1637 = vld [vmem:[%s394 + $0xe0] sm:$0xff]
          %v1638 = vld [vmem:[%s394 + $0xe8] sm:$0xff]
          %v1639 = vld [vmem:[%s394 + $0xf0] sm:$0xff]
          %v1640 = vld [vmem:[%s394 + $0xf8] sm:$0xff]
          %v1641 = vld [vmem:[%s394 + $0x100] sm:$0xff]
          %v1642 = vld [vmem:[%s394 + $0x108] sm:$0xff]
          %v1643 = vld [vmem:[%s394 + $0x110] sm:$0xff]
          %v1644 = vld [vmem:[%s394 + $0x118] sm:$0xff]
          %v1645 = vld [vmem:[%s394 + $0x120] sm:$0xff]
          %v1646 = vld [vmem:[%s394 + $0x128] sm:$0xff]
          %v1647 = vld [vmem:[%s394 + $0x130] sm:$0xff]
          %v1648 = vld [vmem:[%s394 + $0x138] sm:$0xff]
          %v1649 = vld [vmem:[%s394 + $0x140] sm:$0xff]
          %v1650 = vld [vmem:[%s394 + $0x148] sm:$0xff]
          %v1651 = vld [vmem:[%s394 + $0x150] sm:$0xff]
          %v1652 = vld [vmem:[%s394 + $0x158] sm:$0xff]
          %v1653 = vld [vmem:[%s394 + $0x160] sm:$0xff]
          %v1654 = vld [vmem:[%s394 + $0x168] sm:$0xff]
          %v1655 = vld [vmem:[%s394 + $0x170] sm:$0xff]
          %v1656 = vld [vmem:[%s394 + $0x178] sm:$0xff]
          %v1657 = vld [vmem:[%s394 + $0x180] sm:$0xff]
          %v1658 = vld [vmem:[%s394 + $0x188] sm:$0xff]
          %v1659 = vld [vmem:[%s394 + $0x190] sm:$0xff]
          %v1660 = vld [vmem:[%s394 + $0x198] sm:$0xff]
          %v1661 = vld [vmem:[%s394 + $0x1a0] sm:$0xff]
          %v1662 = vld [vmem:[%s394 + $0x1a8] sm:$0xff]
          %v1663 = vld [vmem:[%s394 + $0x1b0] sm:$0xff]
          %v1664 = vld [vmem:[%s394 + $0x1b8] sm:$0xff]
          %v1665 = vld [vmem:[%s394 + $0x1c0] sm:$0xff]
          %v1666 = vld [vmem:[%s394 + $0x1c8] sm:$0xff]
          %v1667 = vld [vmem:[%s394 + $0x1d0] sm:$0xff]
          %v1668 = vld [vmem:[%s394 + $0x1d8] sm:$0xff]
          %v1669 = vld [vmem:[%s394 + $0x1e0] sm:$0xff]
          %v1670 = vld [vmem:[%s394 + $0x1e8] sm:$0xff]
          %v1671 = vld [vmem:[%s394 + $0x1f0] sm:$0xff]
          %v1672 = vld [vmem:[%s394 + $0x1f8] sm:$0xff]
          %v1673 = vld [vmem:[%s394 + $0x200] sm:$0xff]
          %v1674 = vld [vmem:[%s394 + $0x208] sm:$0xff]
          %v1675 = vld [vmem:[%s394 + $0x210] sm:$0xff]
          %v1676 = vld [vmem:[%s394 + $0x218] sm:$0xff]
          %v1677 = vld [vmem:[%s394 + $0x220] sm:$0xff]
          %v1678 = vld [vmem:[%s394 + $0x228] sm:$0xff]
          %v1679 = vld [vmem:[%s394 + $0x230] sm:$0xff]
          %v1680 = vld [vmem:[%s394 + $0x238] sm:$0xff]
          %v1681 = vld [vmem:[%s394 + $0x240] sm:$0xff]
          %v1682 = vld [vmem:[%s394 + $0x248] sm:$0xff]
          %v1683 = vld [vmem:[%s394 + $0x250] sm:$0xff]
          %v1684 = vld [vmem:[%s394 + $0x258] sm:$0xff]
          %v1685 = vld [vmem:[%s394 + $0x260] sm:$0xff]
          %v1686 = vld [vmem:[%s394 + $0x268] sm:$0xff]
          %v1687 = vld [vmem:[%s394 + $0x270] sm:$0xff]
          %v1688 = vld [vmem:[%s394 + $0x278] sm:$0xff]
          %v1689 = vld [vmem:[%s394 + $0x280] sm:$0xff]
          %v1690 = vld [vmem:[%s394 + $0x288] sm:$0xff]
          %v1691 = vld [vmem:[%s394 + $0x290] sm:$0xff]
          %v1692 = vld [vmem:[%s394 + $0x298] sm:$0xff]
          %v1693 = vld [vmem:[%s394 + $0x2a0] sm:$0xff]
          %v1694 = vld [vmem:[%s394 + $0x2a8] sm:$0xff]
          %v1695 = vld [vmem:[%s394 + $0x2b0] sm:$0xff]
          %v1696 = vld [vmem:[%s394 + $0x2b8] sm:$0xff]
          %v1697 = vld [vmem:[%s394 + $0x2c0] sm:$0xff]
          %v1698 = vld [vmem:[%s394 + $0x2c8] sm:$0xff]
          %v1699 = vld [vmem:[%s394 + $0x2d0] sm:$0xff]
          %v1700 = vld [vmem:[%s394 + $0x2d8] sm:$0xff]
          %v1701 = vld [vmem:[%s394 + $0x2e0] sm:$0xff]
          %v1702 = vld [vmem:[%s394 + $0x2e8] sm:$0xff]
          %v1703 = vld [vmem:[%s394 + $0x2f0] sm:$0xff]
          %v1704 = vld [vmem:[%s394 + $0x2f8] sm:$0xff]
          %1705 = vmatprep.subr.mxu0 %v1610
          %1706 = vmatpush1.msra.mxu0 %v1609
          %1707 = vmatprep.subr.mxu0 %v1612
          %1708 = vmatpush1.msra.mxu0 %v1611
          %1709 = vmatprep.subr.mxu0 %v1614
          %1710 = vmatpush1.msra.mxu0 %v1613
          %1711 = vmatprep.subr.mxu0 %v1616
          %1712 = vmatpush1.msra.mxu0 %v1615
          %1713 = vmatprep.subr.mxu0 %v1618
          %1714 = vmatpush1.msra.mxu0 %v1617
          %1715 = vmatprep.subr.mxu0 %v1620
          %1716 = vmatpush1.msra.mxu0 %v1619
          %1717 = vmatprep.subr.mxu0 %v1622
          %1718 = vmatpush1.msra.mxu0 %v1621
          %1719 = vmatprep.subr.mxu0 %v1624
          %1720 = vmatpush1.msra.mxu0 %v1623
          %1721 = vmatprep.subr.mxu0 %v1626
          %1722 = vmatpush1.msra.mxu0 %v1625
          %1723 = vmatprep.subr.mxu0 %v1628
          %1724 = vmatpush1.msra.mxu0 %v1627
          %1725 = vmatprep.subr.mxu0 %v1630
          %1726 = vmatpush1.msra.mxu0 %v1629
          %1727 = vmatprep.subr.mxu0 %v1632
          %1728 = vmatpush1.msra.mxu0 %v1631
          %1729 = vmatprep.subr.mxu0 %v1634
          %1730 = vmatpush1.msra.mxu0 %v1633
          %1731 = vmatprep.subr.mxu0 %v1636
          %1732 = vmatpush1.msra.mxu0 %v1635
          %1733 = vmatprep.subr.mxu0 %v1638
          %1734 = vmatpush1.msra.mxu0 %v1637
          %1735 = vmatprep.subr.mxu0 %v1640
          %1736 = vmatpush1.msra.mxu0 %v1639
          %1737 = vmatprep.subr.mxu0 %v1642
          %1738 = vmatpush1.msra.mxu0 %v1641
          %1739 = vmatprep.subr.mxu0 %v1644
          %1740 = vmatpush1.msra.mxu0 %v1643
          %1741 = vmatprep.subr.mxu0 %v1646
          %1742 = vmatpush1.msra.mxu0 %v1645
          %1743 = vmatprep.subr.mxu0 %v1648
          %1744 = vmatpush1.msra.mxu0 %v1647
          %1745 = vmatprep.subr.mxu0 %v1650
          %1746 = vmatpush1.msra.mxu0 %v1649
          %1747 = vmatprep.subr.mxu0 %v1652
          %1748 = vmatpush1.msra.mxu0 %v1651
          %1749 = vmatprep.subr.mxu0 %v1654
          %1750 = vmatpush1.msra.mxu0 %v1653
          %1751 = vmatprep.subr.mxu0 %v1656
          %1752 = vmatpush1.msra.mxu0 %v1655
          %1753 = vmatprep.subr.mxu0 %v1658
          %1754 = vmatpush1.msra.mxu0 %v1657
          %1755 = vmatprep.subr.mxu0 %v1660
          %1756 = vmatpush1.msra.mxu0 %v1659
          %1757 = vmatprep.subr.mxu0 %v1662
          %1758 = vmatpush1.msra.mxu0 %v1661
          %1759 = vmatprep.subr.mxu0 %v1664
          %1760 = vmatpush1.msra.mxu0 %v1663
          %1761 = vmatprep.subr.mxu0 %v1666
          %1762 = vmatpush1.msra.mxu0 %v1665
          %1763 = vmatprep.subr.mxu0 %v1668
          %1764 = vmatpush1.msra.mxu0 %v1667
          %1765 = vmatprep.subr.mxu0 %v1670
          %1766 = vmatpush1.msra.mxu0 %v1669
          %1767 = vmatprep.subr.mxu0 %v1672
          %1768 = vmatpush1.msra.mxu0 %v1671
          %1769 = vmatprep.mubr.f32.mxu0 %v1562
          %1770 = vmatmul.mubr.f32.gmra.mrb[0].mxu0 %v1561
          %v1771 = vpop.f32.mrb[0].mxu0
          %v1772 = vadd.f32 0.0, %v1771
          %v1773 = vpop.f32.mrb[0].mxu0
          %v1774 = vadd.f32 0.0, %v1773
          %1775 = vmatprep.mubr.f32.mxu0 %v1565
          %1776 = vmatmul.mubr.f32.gmra.mrb[0].mxu0 %v1564
          %v1777 = vpop.f32.mrb[0].mxu0
          %v1778 = vadd.f32 0.0, %v1777
          %v1779 = vpop.f32.mrb[0].mxu0
          %v1780 = vadd.f32 0.0, %v1779
          %1781 = vmatprep.mubr.f32.mxu0 %v1568
          %1782 = vmatmul.mubr.f32.gmra.mrb[0].mxu0 %v1567
          %v1783 = vpop.f32.mrb[0].mxu0
          %v1784 = vadd.f32 0.0, %v1783
          %v1785 = vpop.f32.mrb[0].mxu0
          %v1786 = vadd.f32 0.0, %v1785
          %1787 = vmatprep.mubr.f32.mxu0 %v1571
          %1788 = vmatmul.mubr.f32.gmra.mrb[0].mxu0 %v1570
          %v1789 = vpop.f32.mrb[0].mxu0
          %v1790 = vadd.f32 0.0, %v1789
          %v1791 = vpop.f32.mrb[0].mxu0
          %v1792 = vadd.f32 0.0, %v1791
          %1793 = vmatprep.mubr.f32.mxu0 %v1574
          %1794 = vmatmul.mubr.f32.gmra.mrb[0].mxu0 %v1573
          %v1795 = vpop.f32.mrb[0].mxu0
          %v1796 = vadd.f32 0.0, %v1795
          %v1797 = vpop.f32.mrb[0].mxu0
          %v1798 = vadd.f32 0.0, %v1797
          %1799 = vmatprep.mubr.f32.mxu0 %v1577
          %1800 = vmatmul.mubr.f32.gmra.mrb[0].mxu0 %v1576
          %v1801 = vpop.f32.mrb[0].mxu0
          %v1802 = vadd.f32 0.0, %v1801
          %v1803 = vpop.f32.mrb[0].mxu0
          %v1804 = vadd.f32 0.0, %v1803
          %1805 = vmatprep.mubr.f32.mxu0 %v1580
          %1806 = vmatmul.mubr.f32.gmra.mrb[0].mxu0 %v1579
          %v1807 = vpop.f32.mrb[0].mxu0
          %v1808 = vadd.f32 0.0, %v1807
          %v1809 = vpop.f32.mrb[0].mxu0
          %v1810 = vadd.f32 0.0, %v1809
          %1811 = vmatprep.mubr.f32.mxu0 %v1583
          %1812 = vmatmul.mubr.f32.gmra.mrb[0].mxu0 %v1582
          %v1813 = vpop.f32.mrb[0].mxu0
          %v1814 = vadd.f32 0.0, %v1813
          %v1815 = vpop.f32.mrb[0].mxu0
          %v1816 = vadd.f32 0.0, %v1815
          %1817 = vmatprep.mubr.f32.mxu0 %v1586
          %1818 = vmatmul.mubr.f32.gmra.mrb[0].mxu0 %v1585
          %v1819 = vpop.f32.mrb[0].mxu0
          %v1820 = vadd.f32 0.0, %v1819
          %v1821 = vpop.f32.mrb[0].mxu0
          %v1822 = vadd.f32 0.0, %v1821
          %1823 = vmatprep.mubr.f32.mxu0 %v1589
          %1824 = vmatmul.mubr.f32.gmra.mrb[0].mxu0 %v1588
          %v1825 = vpop.f32.mrb[0].mxu0
          %v1826 = vadd.f32 0.0, %v1825
          %v1827 = vpop.f32.mrb[0].mxu0
          %v1828 = vadd.f32 0.0, %v1827
          %1829 = vmatprep.mubr.f32.mxu0 %v1592
          %1830 = vmatmul.mubr.f32.gmra.mrb[0].mxu0 %v1591
          %v1831 = vpop.f32.mrb[0].mxu0
          %v1832 = vadd.f32 0.0, %v1831
          %v1833 = vpop.f32.mrb[0].mxu0
          %v1834 = vadd.f32 0.0, %v1833
          %1835 = vmatprep.mubr.f32.mxu0 %v1595
          %1836 = vmatmul.mubr.f32.gmra.mrb[0].mxu0 %v1594
          %v1837 = vpop.f32.mrb[0].mxu0
          %v1838 = vadd.f32 0.0, %v1837
          %v1839 = vpop.f32.mrb[0].mxu0
          %v1840 = vadd.f32 0.0, %v1839
          %1841 = vmatprep.mubr.f32.mxu0 %v1598
          %1842 = vmatmul.mubr.f32.gmra.mrb[0].mxu0 %v1597
          %v1843 = vpop.f32.mrb[0].mxu0
          %v1844 = vadd.f32 0.0, %v1843
          %v1845 = vpop.f32.mrb[0].mxu0
          %v1846 = vadd.f32 0.0, %v1845
          %1847 = vmatprep.mubr.f32.mxu0 %v1601
          %1848 = vmatmul.mubr.f32.gmra.mrb[0].mxu0 %v1600
          %v1849 = vpop.f32.mrb[0].mxu0
          %v1850 = vadd.f32 0.0, %v1849
          %v1851 = vpop.f32.mrb[0].mxu0
          %v1852 = vadd.f32 0.0, %v1851
          %1853 = vmatprep.mubr.f32.mxu0 %v1604
          %1854 = vmatmul.mubr.f32.gmra.mrb[0].mxu0 %v1603
          %v1855 = vpop.f32.mrb[0].mxu0
          %v1856 = vadd.f32 0.0, %v1855
          %v1857 = vpop.f32.mrb[0].mxu0
          %v1858 = vadd.f32 0.0, %v1857
          %1859 = vmatprep.mubr.f32.mxu0 %v1607
          %1860 = vmatmul.mubr.f32.gmra.mrb[0].mxu0 %v1606
          %v1861 = vpop.f32.mrb[0].mxu0
          %v1862 = vadd.f32 0.0, %v1861
          %v1863 = vpop.f32.mrb[0].mxu0
          %v1864 = vadd.f32 0.0, %v1863
          %1865 = vdwg.mxu0
          %1866 = vmatprep.subr.mxu0 %v1674
          %1867 = vmatpush1.msra.mxu0 %v1673
          %1868 = vmatprep.subr.mxu0 %v1676
          %1869 = vmatpush1.msra.mxu0 %v1675
          %1870 = vmatprep.subr.mxu0 %v1678
          %1871 = vmatpush1.msra.mxu0 %v1677
          %1872 = vmatprep.subr.mxu0 %v1680
          %1873 = vmatpush1.msra.mxu0 %v1679
          %1874 = vmatprep.subr.mxu0 %v1682
          %1875 = vmatpush1.msra.mxu0 %v1681
          %1876 = vmatprep.subr.mxu0 %v1684
          %1877 = vmatpush1.msra.mxu0 %v1683
          %1878 = vmatprep.subr.mxu0 %v1686
          %1879 = vmatpush1.msra.mxu0 %v1685
          %1880 = vmatprep.subr.mxu0 %v1688
          %1881 = vmatpush1.msra.mxu0 %v1687
          %1882 = vmatprep.subr.mxu0 %v1690
          %1883 = vmatpush1.msra.mxu0 %v1689
          %1884 = vmatprep.subr.mxu0 %v1692
          %1885 = vmatpush1.msra.mxu0 %v1691
          %1886 = vmatprep.subr.mxu0 %v1694
          %1887 = vmatpush1.msra.mxu0 %v1693
          %1888 = vmatprep.subr.mxu0 %v1696
          %1889 = vmatpush1.msra.mxu0 %v1695
          %1890 = vmatprep.subr.mxu0 %v1698
          %1891 = vmatpush1.msra.mxu0 %v1697
          %1892 = vmatprep.subr.mxu0 %v1700
          %1893 = vmatpush1.msra.mxu0 %v1699
          %1894 = vmatprep.subr.mxu0 %v1702
          %1895 = vmatpush1.msra.mxu0 %v1701
          %1896 = vmatprep.subr.mxu0 %v1704
          %1897 = vmatpush1.msra.mxu0 %v1703
          %1898 = vmatprep.subr.mxu0 0.0
          %1899 = vmatpush1.msra.mxu0 0.0
          %1900 = vmatprep.subr.mxu0 0.0
          %1901 = vmatpush1.msra.mxu0 0.0
          %1902 = vmatprep.subr.mxu0 0.0
          %1903 = vmatpush1.msra.mxu0 0.0
          %1904 = vmatprep.subr.mxu0 0.0
          %1905 = vmatpush1.msra.mxu0 0.0
          %1906 = vmatprep.subr.mxu0 0.0
          %1907 = vmatpush1.msra.mxu0 0.0
          %1908 = vmatprep.subr.mxu0 0.0
          %1909 = vmatpush1.msra.mxu0 0.0
          %1910 = vmatprep.subr.mxu0 0.0
          %1911 = vmatpush1.msra.mxu0 0.0
          %1912 = vmatprep.subr.mxu0 0.0
          %1913 = vmatpush1.msra.mxu0 0.0
          %1914 = vmatprep.subr.mxu0 0.0
          %1915 = vmatpush1.msra.mxu0 0.0
          %1916 = vmatprep.subr.mxu0 0.0
          %1917 = vmatpush1.msra.mxu0 0.0
          %1918 = vmatprep.subr.mxu0 0.0
          %1919 = vmatpush1.msra.mxu0 0.0
          %1920 = vmatprep.subr.mxu0 0.0
          %1921 = vmatpush1.msra.mxu0 0.0
          %1922 = vmatprep.subr.mxu0 0.0
          %1923 = vmatpush1.msra.mxu0 0.0
          %1924 = vmatprep.subr.mxu0 0.0
          %1925 = vmatpush1.msra.mxu0 0.0
          %1926 = vmatprep.subr.mxu0 0.0
          %1927 = vmatpush1.msra.mxu0 0.0
          %1928 = vmatprep.subr.mxu0 0.0
          %1929 = vmatpush1.msra.mxu0 0.0
          %1930 = vmatprep.mubr.f32.mxu0 0.0
          %1931 = vmatmul.mubr.f32.gmra.mrb[0].mxu0 %v1563
          %v1932 = vpop.f32.mrb[0].mxu0
          %v1933 = vadd.f32 %v1772, %v1932
          %v1934 = vpop.f32.mrb[0].mxu0
          %v1935 = vadd.f32 %v1774, %v1934
          %1936 = vmatprep.mubr.f32.mxu0 0.0
          %1937 = vmatmul.mubr.f32.gmra.mrb[0].mxu0 %v1566
          %v1938 = vpop.f32.mrb[0].mxu0
          %v1939 = vadd.f32 %v1778, %v1938
          %v1940 = vpop.f32.mrb[0].mxu0
          %v1941 = vadd.f32 %v1780, %v1940
          %1942 = vmatprep.mubr.f32.mxu0 0.0
          %1943 = vmatmul.mubr.f32.gmra.mrb[0].mxu0 %v1569
          %v1944 = vpop.f32.mrb[0].mxu0
          %v1945 = vadd.f32 %v1784, %v1944
          %v1946 = vpop.f32.mrb[0].mxu0
          %v1947 = vadd.f32 %v1786, %v1946
          %1948 = vmatprep.mubr.f32.mxu0 0.0
          %1949 = vmatmul.mubr.f32.gmra.mrb[0].mxu0 %v1572
          %v1950 = vpop.f32.mrb[0].mxu0
          %v1951 = vadd.f32 %v1790, %v1950
          %v1952 = vpop.f32.mrb[0].mxu0
          %v1953 = vadd.f32 %v1792, %v1952
          %1954 = vmatprep.mubr.f32.mxu0 0.0
          %1955 = vmatmul.mubr.f32.gmra.mrb[0].mxu0 %v1575
          %v1956 = vpop.f32.mrb[0].mxu0
          %v1957 = vadd.f32 %v1796, %v1956
          %v1958 = vpop.f32.mrb[0].mxu0
          %v1959 = vadd.f32 %v1798, %v1958
          %1960 = vmatprep.mubr.f32.mxu0 0.0
          %1961 = vmatmul.mubr.f32.gmra.mrb[0].mxu0 %v1578
          %v1962 = vpop.f32.mrb[0].mxu0
          %v1963 = vadd.f32 %v1802, %v1962
          %v1964 = vpop.f32.mrb[0].mxu0
          %v1965 = vadd.f32 %v1804, %v1964
          %1966 = vmatprep.mubr.f32.mxu0 0.0
          %1967 = vmatmul.mubr.f32.gmra.mrb[0].mxu0 %v1581
          %v1968 = vpop.f32.mrb[0].mxu0
          %v1969 = vadd.f32 %v1808, %v1968
          %v1970 = vpop.f32.mrb[0].mxu0
          %v1971 = vadd.f32 %v1810, %v1970
          %1972 = vmatprep.mubr.f32.mxu0 0.0
          %1973 = vmatmul.mubr.f32.gmra.mrb[0].mxu0 %v1584
          %v1974 = vpop.f32.mrb[0].mxu0
          %v1975 = vadd.f32 %v1814, %v1974
          %v1976 = vpop.f32.mrb[0].mxu0
          %v1977 = vadd.f32 %v1816, %v1976
          %1978 = vmatprep.mubr.f32.mxu0 0.0
          %1979 = vmatmul.mubr.f32.gmra.mrb[0].mxu0 %v1587
          %v1980 = vpop.f32.mrb[0].mxu0
          %v1981 = vadd.f32 %v1820, %v1980
          %v1982 = vpop.f32.mrb[0].mxu0
          %v1983 = vadd.f32 %v1822, %v1982
          %1984 = vmatprep.mubr.f32.mxu0 0.0
          %1985 = vmatmul.mubr.f32.gmra.mrb[0].mxu0 %v1590
          %v1986 = vpop.f32.mrb[0].mxu0
          %v1987 = vadd.f32 %v1826, %v1986
          %v1988 = vpop.f32.mrb[0].mxu0
          %v1989 = vadd.f32 %v1828, %v1988
          %1990 = vmatprep.mubr.f32.mxu0 0.0
          %1991 = vmatmul.mubr.f32.gmra.mrb[0].mxu0 %v1593
          %v1992 = vpop.f32.mrb[0].mxu0
          %v1993 = vadd.f32 %v1832, %v1992
          %v1994 = vpop.f32.mrb[0].mxu0
          %v1995 = vadd.f32 %v1834, %v1994
          %1996 = vmatprep.mubr.f32.mxu0 0.0
          %1997 = vmatmul.mubr.f32.gmra.mrb[0].mxu0 %v1596
          %v1998 = vpop.f32.mrb[0].mxu0
          %v1999 = vadd.f32 %v1838, %v1998
          %v2000 = vpop.f32.mrb[0].mxu0
          %v2001 = vadd.f32 %v1840, %v2000
          %2002 = vmatprep.mubr.f32.mxu0 0.0
          %2003 = vmatmul.mubr.f32.gmra.mrb[0].mxu0 %v1599
          %v2004 = vpop.f32.mrb[0].mxu0
          %v2005 = vadd.f32 %v1844, %v2004
          %v2006 = vpop.f32.mrb[0].mxu0
          %v2007 = vadd.f32 %v1846, %v2006
          %2008 = vmatprep.mubr.f32.mxu0 0.0
          %2009 = vmatmul.mubr.f32.gmra.mrb[0].mxu0 %v1602
          %v2010 = vpop.f32.mrb[0].mxu0
          %v2011 = vadd.f32 %v1850, %v2010
          %v2012 = vpop.f32.mrb[0].mxu0
          %v2013 = vadd.f32 %v1852, %v2012
          %2014 = vmatprep.mubr.f32.mxu0 0.0
          %2015 = vmatmul.mubr.f32.gmra.mrb[0].mxu0 %v1605
          %v2016 = vpop.f32.mrb[0].mxu0
          %v2017 = vadd.f32 %v1856, %v2016
          %v2018 = vpop.f32.mrb[0].mxu0
          %v2019 = vadd.f32 %v1858, %v2018
          %2020 = vmatprep.mubr.f32.mxu0 0.0
          %2021 = vmatmul.mubr.f32.gmra.mrb[0].mxu0 %v1608
          %v2022 = vpop.f32.mrb[0].mxu0
          %v2023 = vadd.f32 %v1862, %v2022
          %v2024 = vpop.f32.mrb[0].mxu0
          %v2025 = vadd.f32 %v1864, %v2024
          %2026 = vdwg.mxu0
          // Predicated region
          $region65: #{tpu_custom_call.1} parent=63 // pred_check
            %p2027 = pneg %p477
          $region66: #{tpu_custom_call.1} parent=63 // pred_check_branch
            %2029 = sbr.rel (%p2027) target = $region68
          $region67: #{tpu_custom_call.1} parent=63 // pred_region
            %v2030 = vmul.f32 %v1933, %v1933
            %v2031 = vmul.f32 %v1935, %v1935
            %v2032 = vmul.f32 %v1939, %v1939
            %v2033 = vmul.f32 %v1941, %v1941
            %v2034 = vmul.f32 %v1945, %v1945
            %v2035 = vmul.f32 %v1947, %v1947
            %v2036 = vmul.f32 %v1951, %v1951
            %v2037 = vmul.f32 %v1953, %v1953
            %v2038 = vmul.f32 %v1957, %v1957
            %v2039 = vmul.f32 %v1959, %v1959
            %v2040 = vmul.f32 %v1963, %v1963
            %v2041 = vmul.f32 %v1965, %v1965
            %v2042 = vmul.f32 %v1969, %v1969
            %v2043 = vmul.f32 %v1971, %v1971
            %v2044 = vmul.f32 %v1975, %v1975
            %v2045 = vmul.f32 %v1977, %v1977
            %v2046 = vmul.f32 %v1981, %v1981
            %v2047 = vmul.f32 %v1983, %v1983
            %v2048 = vmul.f32 %v1987, %v1987
            %v2049 = vmul.f32 %v1989, %v1989
            %v2050 = vmul.f32 %v1993, %v1993
            %v2051 = vmul.f32 %v1995, %v1995
            %v2052 = vmul.f32 %v1999, %v1999
            %v2053 = vmul.f32 %v2001, %v2001
            %v2054 = vmul.f32 %v2005, %v2005
            %v2055 = vmul.f32 %v2007, %v2007
            %v2056 = vmul.f32 %v2011, %v2011
            %v2057 = vmul.f32 %v2013, %v2013
            %v2058 = vmul.f32 %v2017, %v2017
            %v2059 = vmul.f32 %v2019, %v2019
            %v2060 = vmul.f32 %v2023, %v2023
            %v2061 = vmul.f32 %v2025, %v2025
            %v2062 = vadd.f32 %v2030, %v2031
            %2063 = vadd.xlane.f32.xlu0 %v2062
            %v2064 = vpop.xlane.xlu0 %2063
            %v2065 = vadd.f32 %v2032, %v2033
            %2066 = vadd.xlane.f32.xlu0 %v2065
            %v2067 = vpop.xlane.xlu0 %2066
            %v2068 = vadd.f32 %v2034, %v2035
            %2069 = vadd.xlane.f32.xlu0 %v2068
            %v2070 = vpop.xlane.xlu0 %2069
            %v2071 = vadd.f32 %v2036, %v2037
            %2072 = vadd.xlane.f32.xlu0 %v2071
            %v2073 = vpop.xlane.xlu0 %2072
            %v2074 = vadd.f32 %v2038, %v2039
            %2075 = vadd.xlane.f32.xlu0 %v2074
            %v2076 = vpop.xlane.xlu0 %2075
            %v2077 = vadd.f32 %v2040, %v2041
            %2078 = vadd.xlane.f32.xlu0 %v2077
            %v2079 = vpop.xlane.xlu0 %2078
            %v2080 = vadd.f32 %v2042, %v2043
            %2081 = vadd.xlane.f32.xlu0 %v2080
            %v2082 = vpop.xlane.xlu0 %2081
            %v2083 = vadd.f32 %v2044, %v2045
            %2084 = vadd.xlane.f32.xlu0 %v2083
            %v2085 = vpop.xlane.xlu0 %2084
            %v2086 = vadd.f32 %v2046, %v2047
            %2087 = vadd.xlane.f32.xlu0 %v2086
            %v2088 = vpop.xlane.xlu0 %2087
            %v2089 = vadd.f32 %v2048, %v2049
            %2090 = vadd.xlane.f32.xlu0 %v2089
            %v2091 = vpop.xlane.xlu0 %2090
            %v2092 = vadd.f32 %v2050, %v2051
            %2093 = vadd.xlane.f32.xlu0 %v2092
            %v2094 = vpop.xlane.xlu0 %2093
            %v2095 = vadd.f32 %v2052, %v2053
            %2096 = vadd.xlane.f32.xlu0 %v2095
            %v2097 = vpop.xlane.xlu0 %2096
            %v2098 = vadd.f32 %v2054, %v2055
            %2099 = vadd.xlane.f32.xlu0 %v2098
            %v2100 = vpop.xlane.xlu0 %2099
            %v2101 = vadd.f32 %v2056, %v2057
            %2102 = vadd.xlane.f32.xlu0 %v2101
            %v2103 = vpop.xlane.xlu0 %2102
            %v2104 = vadd.f32 %v2058, %v2059
            %2105 = vadd.xlane.f32.xlu0 %v2104
            %v2106 = vpop.xlane.xlu0 %2105
            %v2107 = vadd.f32 %v2060, %v2061
            %2108 = vadd.xlane.f32.xlu0 %v2107
            %v2109 = vpop.xlane.xlu0 %2108
            %v2110 = vrcp.pop 256.0
            %v2111 = vmul.f32 %v2064, %v2110
            %v2112 = vmul.f32 %v2067, %v2110
            %v2113 = vmul.f32 %v2070, %v2110
            %v2114 = vmul.f32 %v2073, %v2110
            %v2115 = vmul.f32 %v2076, %v2110
            %v2116 = vmul.f32 %v2079, %v2110
            %v2117 = vmul.f32 %v2082, %v2110
            %v2118 = vmul.f32 %v2085, %v2110
            %v2119 = vmul.f32 %v2088, %v2110
            %v2120 = vmul.f32 %v2091, %v2110
            %v2121 = vmul.f32 %v2094, %v2110
            %v2122 = vmul.f32 %v2097, %v2110
            %v2123 = vmul.f32 %v2100, %v2110
            %v2124 = vmul.f32 %v2103, %v2110
            %v2125 = vmul.f32 %v2106, %v2110
            %v2126 = vmul.f32 %v2109, %v2110
            %v2127 = vadd.f32 %v2111, 1e-05
            %v2128 = vadd.f32 %v2112, 1e-05
            %v2129 = vadd.f32 %v2113, 1e-05
            %v2130 = vadd.f32 %v2114, 1e-05
            %v2131 = vadd.f32 %v2115, 1e-05
            %v2132 = vadd.f32 %v2116, 1e-05
            %v2133 = vadd.f32 %v2117, 1e-05
            %v2134 = vadd.f32 %v2118, 1e-05
            %v2135 = vadd.f32 %v2119, 1e-05
            %v2136 = vadd.f32 %v2120, 1e-05
            %v2137 = vadd.f32 %v2121, 1e-05
            %v2138 = vadd.f32 %v2122, 1e-05
            %v2139 = vadd.f32 %v2123, 1e-05
            %v2140 = vadd.f32 %v2124, 1e-05
            %v2141 = vadd.f32 %v2125, 1e-05
            %v2142 = vadd.f32 %v2126, 1e-05
            %v2143 = vrsqrt.pop %v2127
            %v2144 = vrsqrt.pop %v2128
            %v2145 = vrsqrt.pop %v2129
            %v2146 = vrsqrt.pop %v2130
            %v2147 = vrsqrt.pop %v2131
            %v2148 = vrsqrt.pop %v2132
            %v2149 = vrsqrt.pop %v2133
            %v2150 = vrsqrt.pop %v2134
            %v2151 = vrsqrt.pop %v2135
            %v2152 = vrsqrt.pop %v2136
            %v2153 = vrsqrt.pop %v2137
            %v2154 = vrsqrt.pop %v2138
            %v2155 = vrsqrt.pop %v2139
            %v2156 = vrsqrt.pop %v2140
            %v2157 = vrsqrt.pop %v2141
            %v2158 = vrsqrt.pop %v2142
            %v2159 = vmul.f32 %v1933, %v2143
            %v2160 = vmul.f32 %v1935, %v2143
            %v2161 = vmul.f32 %v1939, %v2144
            %v2162 = vmul.f32 %v1941, %v2144
            %v2163 = vmul.f32 %v1945, %v2145
            %v2164 = vmul.f32 %v1947, %v2145
            %v2165 = vmul.f32 %v1951, %v2146
            %v2166 = vmul.f32 %v1953, %v2146
            %v2167 = vmul.f32 %v1957, %v2147
            %v2168 = vmul.f32 %v1959, %v2147
            %v2169 = vmul.f32 %v1963, %v2148
            %v2170 = vmul.f32 %v1965, %v2148
            %v2171 = vmul.f32 %v1969, %v2149
            %v2172 = vmul.f32 %v1971, %v2149
            %v2173 = vmul.f32 %v1975, %v2150
            %v2174 = vmul.f32 %v1977, %v2150
            %v2175 = vmul.f32 %v1981, %v2151
            %v2176 = vmul.f32 %v1983, %v2151
            %v2177 = vmul.f32 %v1987, %v2152
            %v2178 = vmul.f32 %v1989, %v2152
            %v2179 = vmul.f32 %v1993, %v2153
            %v2180 = vmul.f32 %v1995, %v2153
            %v2181 = vmul.f32 %v1999, %v2154
            %v2182 = vmul.f32 %v2001, %v2154
            %v2183 = vmul.f32 %v2005, %v2155
            %v2184 = vmul.f32 %v2007, %v2155
            %v2185 = vmul.f32 %v2011, %v2156
            %v2186 = vmul.f32 %v2013, %v2156
            %v2187 = vmul.f32 %v2017, %v2157
            %v2188 = vmul.f32 %v2019, %v2157
            %v2189 = vmul.f32 %v2023, %v2158
            %v2190 = vmul.f32 %v2025, %v2158
            %v2191 = vld [vmem:[%s403] sm:$0x3]
            %v2193 = vlaneseq
            %v2194 = vshrl.u32 %v2193, 7
            %v2195 = vsub.s32 0, %v2194
            %v2196 = vrot.slane %v2191, %v2195
            %v2197 = vlaneseq
            %v2198 = vshrl.u32 %v2197, 7
            %v2199 = vsub.s32 1, %v2198
            %v2200 = vrot.slane %v2191, %v2199
            %v2203 = vmul.f32 %v2159, %v2196
            %v2204 = vmul.f32 %v2160, %v2200
            %v2205 = vmul.f32 %v2161, %v2196
            %v2206 = vmul.f32 %v2162, %v2200
            %v2207 = vmul.f32 %v2163, %v2196
            %v2208 = vmul.f32 %v2164, %v2200
            %v2209 = vmul.f32 %v2165, %v2196
            %v2210 = vmul.f32 %v2166, %v2200
            %v2211 = vmul.f32 %v2167, %v2196
            %v2212 = vmul.f32 %v2168, %v2200
            %v2213 = vmul.f32 %v2169, %v2196
            %v2214 = vmul.f32 %v2170, %v2200
            %v2215 = vmul.f32 %v2171, %v2196
            %v2216 = vmul.f32 %v2172, %v2200
            %v2217 = vmul.f32 %v2173, %v2196
            %v2218 = vmul.f32 %v2174, %v2200
            %v2219 = vmul.f32 %v2175, %v2196
            %v2220 = vmul.f32 %v2176, %v2200
            %v2221 = vmul.f32 %v2177, %v2196
            %v2222 = vmul.f32 %v2178, %v2200
            %v2223 = vmul.f32 %v2179, %v2196
            %v2224 = vmul.f32 %v2180, %v2200
            %v2225 = vmul.f32 %v2181, %v2196
            %v2226 = vmul.f32 %v2182, %v2200
            %v2227 = vmul.f32 %v2183, %v2196
            %v2228 = vmul.f32 %v2184, %v2200
            %v2229 = vmul.f32 %v2185, %v2196
            %v2230 = vmul.f32 %v2186, %v2200
            %v2231 = vmul.f32 %v2187, %v2196
            %v2232 = vmul.f32 %v2188, %v2200
            %v2233 = vmul.f32 %v2189, %v2196
            %v2234 = vmul.f32 %v2190, %v2200
            %v2235 = vld [vmem:[%s454] sm:$0xff]
            %v2236 = vld [vmem:[%s454 + $0x8] sm:$0xff]
            %v2237 = vld [vmem:[%s454 + $0x10] sm:$0xff]
            %v2238 = vld [vmem:[%s454 + $0x18] sm:$0xff]
            %v2239 = vld [vmem:[%s454 + $0x20] sm:$0xff]
            %v2240 = vld [vmem:[%s454 + $0x28] sm:$0xff]
            %v2241 = vld [vmem:[%s454 + $0x30] sm:$0xff]
            %v2242 = vld [vmem:[%s454 + $0x38] sm:$0xff]
            %v2243 = vld [vmem:[%s454 + $0x40] sm:$0xff]
            %v2244 = vld [vmem:[%s454 + $0x48] sm:$0xff]
            %v2245 = vld [vmem:[%s454 + $0x50] sm:$0xff]
            %v2246 = vld [vmem:[%s454 + $0x58] sm:$0xff]
            %v2247 = vld [vmem:[%s454 + $0x60] sm:$0xff]
            %v2248 = vld [vmem:[%s454 + $0x68] sm:$0xff]
            %v2249 = vld [vmem:[%s454 + $0x70] sm:$0xff]
            %v2250 = vld [vmem:[%s454 + $0x78] sm:$0xff]
            %v2251 = vstv %s42
            %vm2252 = vcmp.eq.s32.totalorder %v2235, %v2251
            %vm2253 = vcmp.eq.s32.totalorder %v2236, %v2251
            %vm2254 = vcmp.eq.s32.totalorder %v2237, %v2251
            %vm2255 = vcmp.eq.s32.totalorder %v2238, %v2251
            %vm2256 = vcmp.eq.s32.totalorder %v2239, %v2251
            %vm2257 = vcmp.eq.s32.totalorder %v2240, %v2251
            %vm2258 = vcmp.eq.s32.totalorder %v2241, %v2251
            %vm2259 = vcmp.eq.s32.totalorder %v2242, %v2251
            %vm2260 = vcmp.eq.s32.totalorder %v2243, %v2251
            %vm2261 = vcmp.eq.s32.totalorder %v2244, %v2251
            %vm2262 = vcmp.eq.s32.totalorder %v2245, %v2251
            %vm2263 = vcmp.eq.s32.totalorder %v2246, %v2251
            %vm2264 = vcmp.eq.s32.totalorder %v2247, %v2251
            %vm2265 = vcmp.eq.s32.totalorder %v2248, %v2251
            %vm2266 = vcmp.eq.s32.totalorder %v2249, %v2251
            %vm2267 = vcmp.eq.s32.totalorder %v2250, %v2251
            %v2268 = vld [vmem:[%s449] sm:$0xff]
            %v2269 = vld [vmem:[%s449 + $0x8] sm:$0xff]
            %v2270 = vld [vmem:[%s449 + $0x10] sm:$0xff]
            %v2271 = vld [vmem:[%s449 + $0x18] sm:$0xff]
            %v2272 = vld [vmem:[%s449 + $0x20] sm:$0xff]
            %v2273 = vld [vmem:[%s449 + $0x28] sm:$0xff]
            %v2274 = vld [vmem:[%s449 + $0x30] sm:$0xff]
            %v2275 = vld [vmem:[%s449 + $0x38] sm:$0xff]
            %v2276 = vld [vmem:[%s449 + $0x40] sm:$0xff]
            %v2277 = vld [vmem:[%s449 + $0x48] sm:$0xff]
            %v2278 = vld [vmem:[%s449 + $0x50] sm:$0xff]
            %v2279 = vld [vmem:[%s449 + $0x58] sm:$0xff]
            %v2280 = vld [vmem:[%s449 + $0x60] sm:$0xff]
            %v2281 = vld [vmem:[%s449 + $0x68] sm:$0xff]
            %v2282 = vld [vmem:[%s449 + $0x70] sm:$0xff]
            %v2283 = vld [vmem:[%s449 + $0x78] sm:$0xff]
            %v2284 = vld [vmem:[%s449 + $0x80] sm:$0xff]
            %v2285 = vld [vmem:[%s449 + $0x88] sm:$0xff]
            %v2286 = vld [vmem:[%s449 + $0x90] sm:$0xff]
            %v2287 = vld [vmem:[%s449 + $0x98] sm:$0xff]
            %v2288 = vld [vmem:[%s449 + $0xa0] sm:$0xff]
            %v2289 = vld [vmem:[%s449 + $0xa8] sm:$0xff]
            %v2290 = vld [vmem:[%s449 + $0xb0] sm:$0xff]
            %v2291 = vld [vmem:[%s449 + $0xb8] sm:$0xff]
            %v2292 = vld [vmem:[%s449 + $0xc0] sm:$0xff]
            %v2293 = vld [vmem:[%s449 + $0xc8] sm:$0xff]
            %v2294 = vld [vmem:[%s449 + $0xd0] sm:$0xff]
            %v2295 = vld [vmem:[%s449 + $0xd8] sm:$0xff]
            %v2296 = vld [vmem:[%s449 + $0xe0] sm:$0xff]
            %v2297 = vld [vmem:[%s449 + $0xe8] sm:$0xff]
            %v2298 = vld [vmem:[%s449 + $0xf0] sm:$0xff]
            %v2299 = vld [vmem:[%s449 + $0xf8] sm:$0xff]
            %v2300 = vsel %vm2252, 1, 0
            %v2301 = vsel %vm2253, 1, 0
            %v2302 = vsel %vm2254, 1, 0
            %v2303 = vsel %vm2255, 1, 0
            %v2304 = vsel %vm2256, 1, 0
            %v2305 = vsel %vm2257, 1, 0
            %v2306 = vsel %vm2258, 1, 0
            %v2307 = vsel %vm2259, 1, 0
            %v2308 = vsel %vm2260, 1, 0
            %v2309 = vsel %vm2261, 1, 0
            %v2310 = vsel %vm2262, 1, 0
            %v2311 = vsel %vm2263, 1, 0
            %v2312 = vsel %vm2264, 1, 0
            %v2313 = vsel %vm2265, 1, 0
            %v2314 = vsel %vm2266, 1, 0
            %v2315 = vsel %vm2267, 1, 0
            %2316 = vset.pattern.permute.xlu0 0
            %2317 = vperm.xlu0 %2316, %v2300
            %v2318 = vpop.permute.xlu0 %2317
            %2319 = vset.pattern.permute.xlu0 0
            %2320 = vperm.xlu0 %2319, %v2301
            %v2321 = vpop.permute.xlu0 %2320
            %2322 = vset.pattern.permute.xlu0 0
            %2323 = vperm.xlu0 %2322, %v2302
            %v2324 = vpop.permute.xlu0 %2323
            %2325 = vset.pattern.permute.xlu0 0
            %2326 = vperm.xlu0 %2325, %v2303
            %v2327 = vpop.permute.xlu0 %2326
            %2328 = vset.pattern.permute.xlu0 0
            %2329 = vperm.xlu0 %2328, %v2304
            %v2330 = vpop.permute.xlu0 %2329
            %2331 = vset.pattern.permute.xlu0 0
            %2332 = vperm.xlu0 %2331, %v2305
            %v2333 = vpop.permute.xlu0 %2332
            %2334 = vset.pattern.permute.xlu0 0
            %2335 = vperm.xlu0 %2334, %v2306
            %v2336 = vpop.permute.xlu0 %2335
            %2337 = vset.pattern.permute.xlu0 0
            %2338 = vperm.xlu0 %2337, %v2307
            %v2339 = vpop.permute.xlu0 %2338
            %2340 = vset.pattern.permute.xlu0 0
            %2341 = vperm.xlu0 %2340, %v2308
            %v2342 = vpop.permute.xlu0 %2341
            %2343 = vset.pattern.permute.xlu0 0
            %2344 = vperm.xlu0 %2343, %v2309
            %v2345 = vpop.permute.xlu0 %2344
            %2346 = vset.pattern.permute.xlu0 0
            %2347 = vperm.xlu0 %2346, %v2310
            %v2348 = vpop.permute.xlu0 %2347
            %2349 = vset.pattern.permute.xlu0 0
            %2350 = vperm.xlu0 %2349, %v2311
            %v2351 = vpop.permute.xlu0 %2350
            %2352 = vset.pattern.permute.xlu0 0
            %2353 = vperm.xlu0 %2352, %v2312
            %v2354 = vpop.permute.xlu0 %2353
            %2355 = vset.pattern.permute.xlu0 0
            %2356 = vperm.xlu0 %2355, %v2313
            %v2357 = vpop.permute.xlu0 %2356
            %2358 = vset.pattern.permute.xlu0 0
            %2359 = vperm.xlu0 %2358, %v2314
            %v2360 = vpop.permute.xlu0 %2359
            %2361 = vset.pattern.permute.xlu0 0
            %2362 = vperm.xlu0 %2361, %v2315
            %v2363 = vpop.permute.xlu0 %2362
            %vm2364 = vcmp.eq.s32.totalorder %v2318, 1
            %vm2365 = vcmp.eq.s32.totalorder %v2321, 1
            %vm2366 = vcmp.eq.s32.totalorder %v2324, 1
            %vm2367 = vcmp.eq.s32.totalorder %v2327, 1
            %vm2368 = vcmp.eq.s32.totalorder %v2330, 1
            %vm2369 = vcmp.eq.s32.totalorder %v2333, 1
            %vm2370 = vcmp.eq.s32.totalorder %v2336, 1
            %vm2371 = vcmp.eq.s32.totalorder %v2339, 1
            %vm2372 = vcmp.eq.s32.totalorder %v2342, 1
            %vm2373 = vcmp.eq.s32.totalorder %v2345, 1
            %vm2374 = vcmp.eq.s32.totalorder %v2348, 1
            %vm2375 = vcmp.eq.s32.totalorder %v2351, 1
            %vm2376 = vcmp.eq.s32.totalorder %v2354, 1
            %vm2377 = vcmp.eq.s32.totalorder %v2357, 1
            %vm2378 = vcmp.eq.s32.totalorder %v2360, 1
            %vm2379 = vcmp.eq.s32.totalorder %v2363, 1
            %v2380 = vsel %vm2364, %v2203, %v2268
            %v2381 = vsel %vm2364, %v2204, %v2269
            %v2382 = vsel %vm2365, %v2205, %v2270
            %v2383 = vsel %vm2365, %v2206, %v2271
            %v2384 = vsel %vm2366, %v2207, %v2272
            %v2385 = vsel %vm2366, %v2208, %v2273
            %v2386 = vsel %vm2367, %v2209, %v2274
            %v2387 = vsel %vm2367, %v2210, %v2275
            %v2388 = vsel %vm2368, %v2211, %v2276
            %v2389 = vsel %vm2368, %v2212, %v2277
            %v2390 = vsel %vm2369, %v2213, %v2278
            %v2391 = vsel %vm2369, %v2214, %v2279
            %v2392 = vsel %vm2370, %v2215, %v2280
            %v2393 = vsel %vm2370, %v2216, %v2281
            %v2394 = vsel %vm2371, %v2217, %v2282
            %v2395 = vsel %vm2371, %v2218, %v2283
            %v2396 = vsel %vm2372, %v2219, %v2284
            %v2397 = vsel %vm2372, %v2220, %v2285
            %v2398 = vsel %vm2373, %v2221, %v2286
            %v2399 = vsel %vm2373, %v2222, %v2287
            %v2400 = vsel %vm2374, %v2223, %v2288
            %v2401 = vsel %vm2374, %v2224, %v2289
            %v2402 = vsel %vm2375, %v2225, %v2290
            %v2403 = vsel %vm2375, %v2226, %v2291
            %v2404 = vsel %vm2376, %v2227, %v2292
            %v2405 = vsel %vm2376, %v2228, %v2293
            %v2406 = vsel %vm2377, %v2229, %v2294
            %v2407 = vsel %vm2377, %v2230, %v2295
            %v2408 = vsel %vm2378, %v2231, %v2296
            %v2409 = vsel %vm2378, %v2232, %v2297
            %v2410 = vsel %vm2379, %v2233, %v2298
            %v2411 = vsel %vm2379, %v2234, %v2299
            %2412 = vst [vmem:[%s449] sm:$0xff] %v2380
            %2413 = vst [vmem:[%s449 + $0x8] sm:$0xff] %v2381
            %2414 = vst [vmem:[%s449 + $0x10] sm:$0xff] %v2382
            %2415 = vst [vmem:[%s449 + $0x18] sm:$0xff] %v2383
            %2416 = vst [vmem:[%s449 + $0x20] sm:$0xff] %v2384
            %2417 = vst [vmem:[%s449 + $0x28] sm:$0xff] %v2385
            %2418 = vst [vmem:[%s449 + $0x30] sm:$0xff] %v2386
            %2419 = vst [vmem:[%s449 + $0x38] sm:$0xff] %v2387
            %2420 = vst [vmem:[%s449 + $0x40] sm:$0xff] %v2388
            %2421 = vst [vmem:[%s449 + $0x48] sm:$0xff] %v2389
            %2422 = vst [vmem:[%s449 + $0x50] sm:$0xff] %v2390
            %2423 = vst [vmem:[%s449 + $0x58] sm:$0xff] %v2391
            %2424 = vst [vmem:[%s449 + $0x60] sm:$0xff] %v2392
            %2425 = vst [vmem:[%s449 + $0x68] sm:$0xff] %v2393
            %2426 = vst [vmem:[%s449 + $0x70] sm:$0xff] %v2394
            %2427 = vst [vmem:[%s449 + $0x78] sm:$0xff] %v2395
            %2428 = vst [vmem:[%s449 + $0x80] sm:$0xff] %v2396
            %2429 = vst [vmem:[%s449 + $0x88] sm:$0xff] %v2397
            %2430 = vst [vmem:[%s449 + $0x90] sm:$0xff] %v2398
            %2431 = vst [vmem:[%s449 + $0x98] sm:$0xff] %v2399
            %2432 = vst [vmem:[%s449 + $0xa0] sm:$0xff] %v2400
            %2433 = vst [vmem:[%s449 + $0xa8] sm:$0xff] %v2401
            %2434 = vst [vmem:[%s449 + $0xb0] sm:$0xff] %v2402
            %2435 = vst [vmem:[%s449 + $0xb8] sm:$0xff] %v2403
            %2436 = vst [vmem:[%s449 + $0xc0] sm:$0xff] %v2404
            %2437 = vst [vmem:[%s449 + $0xc8] sm:$0xff] %v2405
            %2438 = vst [vmem:[%s449 + $0xd0] sm:$0xff] %v2406
            %2439 = vst [vmem:[%s449 + $0xd8] sm:$0xff] %v2407
            %2440 = vst [vmem:[%s449 + $0xe0] sm:$0xff] %v2408
            %2441 = vst [vmem:[%s449 + $0xe8] sm:$0xff] %v2409
            %2442 = vst [vmem:[%s449 + $0xf0] sm:$0xff] %v2410
            %2443 = vst [vmem:[%s449 + $0xf8] sm:$0xff] %v2411
          $region68: #{tpu_custom_call.1} parent=63 // pred_fallthru
            _
        $region64: #{tpu_custom_call.1} parent=39 // pred_fallthru
          _
        %s2444 = sand.u32 %s223, 1
        %s2445 = scalar_lea.sflag [#allocation8], %s2444
        %s2446 = sand.u32 %s223, 1
        %s2447 = smul.addr %s2446, 256
        %s2448 = scalar_lea.vmem [#allocation14], %s2447
        // Predicated region
        $region69: #{tpu_custom_call.1} parent=39 // pred_check
          %p2449 = pneg %p233
        $region70: #{tpu_custom_call.1} parent=39 // pred_check_branch
          %2451 = sbr.rel (%p2449) target = $region72
        $region71: #{tpu_custom_call.1} parent=39 // pred_region
          %s2452 = smul.u32 16, %s41
          %s2454 = ssub.s32 4096, 4096
          %2455 = vsyncadd %s2445, %s2454
          %s2456 = smul.addr %s2452, 2
          %s2457 = smul.addr %s2456, 128
          %s2458 = scalar_lea.hbm %s7, %s2457
          %s2459 = sshll.u32 %s2448, 4
          %s2460 = int_to_ptr.vmem [resolvable:$true] %s2459
          %2465 = dma.vmem_to_hbm [thread:$0]  %s2460, 4096, %s2458, %s2445, 256, 256, 16
        $region72: #{tpu_custom_call.1} parent=39 // pred_fallthru
          _
      $region40: #{tpu_custom_call.1} parent=5 // pred_fallthru
        _
      %p2466 = scmp.le.s32.totalorder 2, %s31
      // Predicated region
      $region73: #{tpu_custom_call.1} parent=5 // pred_check
        %p2467 = pneg %p2466
      $region74: #{tpu_custom_call.1} parent=5 // pred_check_branch
        %2469 = sbr.rel (%p2467) target = $region76
      $region75: #{tpu_custom_call.1} parent=5 // pred_region
        %s2470 = ssub.s32 %s31, 2
        // Predicated region
        $region77: #{tpu_custom_call.1} parent=75 // pred_check
          %p2471 = pneg %p239
        $region78: #{tpu_custom_call.1} parent=75 // pred_check_branch
          %2473 = sbr.rel (%p2471) target = $region80
        $region79: #{tpu_custom_call.1} parent=75 // pred_region
          %s2474 = sand.u32 %s224, 1
          %s2475 = scalar_lea.sflag [#allocation8], %s2474
          %s2476 = sand.u32 %s224, 1
          %s2477 = smul.addr %s2476, 256
          %s2478 = scalar_lea.vmem [#allocation14], %s2477
          %2479 = dma.done %s2475, 4096
        $region80: #{tpu_custom_call.1} parent=75 // pred_fallthru
          _
      $region76: #{tpu_custom_call.1} parent=5 // pred_fallthru
        _
    $region6: #{tpu_custom_call.1} parent=1 // loop_footer
      %s35 = sadd.s32 1, %s31
    $region7: #{tpu_custom_call.1} parent=1 // loop_footer_branch
      %30 = sbr.rel target = $region3
    $region8: #{tpu_custom_call.1} parent=1 // loop_exit
      _
    %2480 = vsyncpa [#allocation7], 1
    %s2481 = scalar_lea.sflag [#allocation7], 1
    %2482 = vsyncpa %s2481, 1
    %2483 = vsyncpa [#allocation10], 1
    %s2484 = scalar_lea.sflag [#allocation10], 1
    %2485 = vsyncpa %s2484, 1
    %2486 = vsyncpa [#allocation13], 1
    %s2487 = scalar_lea.sflag [#allocation13], 1
    %2488 = vsyncpa %s2487, 1
    %2489 = vsyncpa [#allocation8], 1
    %s2490 = scalar_lea.sflag [#allocation8], 1
    %2491 = vsyncpa %s2490, 1

</llo_original>
